<compile_context>
chip_gen: v5e
topology: v5e:2x2
jax: 0.10.0
libtpu: 0.0.40
codegen_flags: <defaults>
</compile_context>

<pallas_src>
import numpy as np
import jax
import jax.numpy as jnp
from jax.experimental import pallas as pl
from jax.experimental.pallas import tpu as pltpu


# ------------------------------ helpers -------------------------------------

def _round16(x):
    return ((x + 15) // 16) * 16


# --------------------------- fused Pallas kernel ----------------------------

def _make_kernel(layout):
    """Build the fused per-sample forward kernel; `layout` maps weight name ->
    (row_offset, rows, cols) inside the packed bf16 weight slab."""
    f32 = jnp.float32
    bf16 = jnp.bfloat16

    def kernel(xci_ref, xcs_ref, w_ref, b_ref, out_ref):
        def w(name):
            off, r, c = layout[name]
            return w_ref[off:off + r, :][:, :c]          # static slab window (bf16)

        def bias(row, c):
            return b_ref[row:row + 1, :][:, :c]          # f32 bias row

        # ----------------- frozen image encoder -----------------
        # conv1 as im2col GEMM: (64,36) @ (36,16) ; out channels 8..15 are zero pad
        xc = xci_ref[0].astype(bf16)                                    # (64, 36)
        h1 = jnp.dot(xc, w("W1i"), preferred_element_type=f32) + bias(0, 16)
        h1 = jnp.maximum(h1, 0.0)                                       # (64, 16)

        # conv2 tap-wise: spatial selection (0/1 matrix) then per-tap channel matmuls
        sel = jnp.dot(w("S2i"), h1.astype(bf16), preferred_element_type=f32)   # (144, 16)
        w2i = w("W2i")                                                  # (144, 16)
        h2 = jnp.zeros((16, 16), f32)
        for t in range(9):
            h2 = h2 + jnp.dot(sel[16 * t:16 * (t + 1), :].astype(bf16),
                              w2i[16 * t:16 * (t + 1), :],
                              preferred_element_type=f32)
        h2 = jnp.maximum(h2 + bias(2, 16), 0.0)                         # (16 q, 16 c)

        # AdaptiveAvgPool2d((2,2)) + flatten + fc_mu (folded, small)
        pooled = jnp.dot(w("PPi"), h2.astype(bf16), preferred_element_type=f32)  # (4, 16)
        wmu_i = w("WMUi")                                               # (64, 32)
        mu_i = bias(4, 32)                                              # (1, 32) f32
        for j in range(4):
            mu_i = mu_i + jnp.dot(pooled[j:j + 1, :].astype(bf16),
                                  wmu_i[16 * j:16 * (j + 1), :],
                                  preferred_element_type=f32)

        # ----------------- frozen signal encoder -----------------
        xs = xcs_ref[0].astype(bf16)                                    # (8, 7)
        g1 = jnp.maximum(jnp.dot(xs, w("W1s"), preferred_element_type=f32)
                         + bias(1, 16), 0.0)                            # (8, 16)

        sels = jnp.dot(w("S2s"), g1.astype(bf16), preferred_element_type=f32)   # (56, 16)
        w2s = w("W2s")                                                  # (112, 16)
        g2 = jnp.zeros((8, 16), f32)
        for k in range(7):
            g2 = g2 + jnp.dot(sels[8 * k:8 * (k + 1), :].astype(bf16),
                              w2s[16 * k:16 * (k + 1), :],
                              preferred_element_type=f32)
        g2 = jnp.maximum(g2 + bias(3, 16), 0.0)                         # (8 q, 16 c) rows 4..7 unused

        pooled_s = jnp.dot(w("PPs"), g2.astype(bf16), preferred_element_type=f32)  # (2, 16)
        wmu_s = w("WMUs")                                               # (32, 32)
        mu_s = bias(5, 32)                                              # (1, 32)
        for j in range(2):
            mu_s = mu_s + jnp.dot(pooled_s[j:j + 1, :].astype(bf16),
                                  wmu_s[16 * j:16 * (j + 1), :],
                                  preferred_element_type=f32)

        # ----------------- classifier head -----------------
        # cat(mu_image, mu_signal) @ W1 == mu_image @ W1[:L] + mu_signal @ W1[L:]
        hc = (jnp.dot(mu_i.astype(bf16), w("Wc1a"), preferred_element_type=f32)
              + jnp.dot(mu_s.astype(bf16), w("Wc1b"), preferred_element_type=f32)
              + bias(6, 128))
        hc = jnp.maximum(hc, 0.0)
        # TODO(synk): Dropout(p=0.5) is eval-mode identity; training-mode masking
        # (pltpu.prng_seed / prng_random_bits) not implemented.
        logits = jnp.dot(hc.astype(bf16), w("Wc2p"), preferred_element_type=f32) + bias(7, 128)
        out_ref[0] = logits                                             # (1, 128) lane-dense

    return kernel


# ----------------------- host-side (XLA) input layout ------------------------

def _im2col_image(image):
    """(B,4,16,16) -> (B, 64, 36) patches for Conv2d(k3, s2, p1); cols = ci*9 + ki*3 + kj."""
    B = image.shape[0]
    xp = jnp.pad(image, ((0, 0), (0, 0), (1, 1), (1, 1)))
    taps = [xp[:, :, ki:ki + 15:2, kj:kj + 15:2]
            for ki in range(3) for kj in range(3)]        # each (B,4,8,8)
    pat = jnp.stack(taps, axis=2)                          # (B, 4, 9, 8, 8)
    return pat.reshape(B, 36, 64).transpose(0, 2, 1)       # (B, 64, 36)


def _im2col_signal(signal):
    """(B,1,16) -> (B, 8, 7) patches for Conv1d(k7, s2, p3); cols = k."""
    sp = jnp.pad(signal, ((0, 0), (0, 0), (3, 3)))         # (B,1,22)
    taps = [sp[:, 0, k:k + 15:2] for k in range(7)]        # each (B,8)
    return jnp.stack(taps, axis=2)                         # (B, 8, 7)


def build_forward(layout, *, num_classes):
    kernel = _make_kernel(layout)

    @jax.jit
    def forward(image, signal, wslab, bslab):
        B = image.shape[0]
        x_img = _im2col_image(image.astype(jnp.float32))   # (B, 64, 36)
        x_sig = _im2col_signal(signal.astype(jnp.float32))  # (B, 8, 7)
        R = wslab.shape[0]
        out = pl.pallas_call(
            kernel,
            out_shape=jax.ShapeDtypeStruct((B, 1, 128), jnp.float32),
            grid=(B,),
            in_specs=[
                pl.BlockSpec((1, 64, 36), lambda b: (b, 0, 0)),
                pl.BlockSpec((1, 8, 7), lambda b: (b, 0, 0)),
                pl.BlockSpec((R, 128), lambda b: (0, 0)),    # weight slab, VMEM-resident
                pl.BlockSpec((8, 128), lambda b: (0, 0)),    # bias slab
            ],
            out_specs=pl.BlockSpec((1, 1, 128), lambda b: (b, 0, 0)),
            compiler_params=pltpu.CompilerParams(
                dimension_semantics=("parallel",)),          # v7x: 2 TCs split the batch
        )(x_img, x_sig, wslab, bslab)
        return out[:, 0, :num_classes]

    return forward


# -------------------- init-time weight folding / packing --------------------

def prepare_params(raw):
    """Fold encoders + classifier into small GEMM-ready matrices and pack them
    into one bf16 weight slab (R,128) + one f32 bias slab (8,128)."""
    f = lambda v: np.asarray(v, np.float32)

    # ---- image encoder ----
    w1 = f(raw["img_conv1_w"])                      # (8,4,3,3)
    W1i = np.zeros((36, 16), np.float32)
    W1i[:, :8] = w1.reshape(8, 36).T                # cols 8..15 = zero channel pad

    w2 = f(raw["img_conv2_w"])                      # (16,8,3,3)
    S2i = np.zeros((144, 64), np.float32)           # [t*16+q, src_pos] 0/1
    W2i = np.zeros((144, 16), np.float32)           # [t*16+c, c2]
    for ki in range(3):
        for kj in range(3):
            t = ki * 3 + kj
            for c in range(8):
                W2i[16 * t + c, :] = w2[:, c, ki, kj]
            for ho in range(4):
                for wo in range(4):
                    hs, ws = 2 * ho - 1 + ki, 2 * wo - 1 + kj
                    if 0 <= hs < 8 and 0 <= ws < 8:
                        S2i[16 * t + ho * 4 + wo, hs * 8 + ws] = 1.0

    PPi = np.zeros((4, 16), np.float32)             # AdaptiveAvgPool2d((2,2)) on 4x4
    for i2 in range(2):
        for j2 in range(2):
            for dh in range(2):
                for dw in range(2):
                    PPi[i2 * 2 + j2, (2 * i2 + dh) * 4 + (2 * j2 + dw)] = 0.25

    fcmu_i = f(raw["img_fc_mu_w"])                  # (32, 64) over flatten c*4 + j
    WMUi = np.zeros((64, 32), np.float32)           # [j*16+c, l]
    for j in range(4):
        for c in range(16):
            WMUi[16 * j + c, :] = fcmu_i[:, c * 4 + j]

    # ---- signal encoder ----
    w1s = f(raw["sig_conv1_w"])                     # (8,1,7)
    W1s = np.zeros((7, 16), np.float32)
    W1s[:, :8] = w1s.reshape(8, 7).T

    w2s = f(raw["sig_conv2_w"])                     # (16,8,7)
    S2s = np.zeros((56, 8), np.float32)             # [k*8+q, src_pos]; q rows padded to 8
    W2s = np.zeros((112, 16), np.float32)           # [k*16+c, c2]
    for k in range(7):
        for c in range(8):
            W2s[16 * k + c, :] = w2s[:, c, k]
        for q in range(4):
            s = 2 * q - 3 + k
            if 0 <= s < 8:
                S2s[8 * k + q, s] = 1.0

    PPs = np.zeros((2, 8), np.float32)              # AdaptiveAvgPool1d(2) on length 4
    for j in range(2):
        PPs[j, 2 * j] = 0.5
        PPs[j, 2 * j + 1] = 0.5

    fcmu_s = f(raw["sig_fc_mu_w"])                  # (32, 32) over flatten c*2 + j
    WMUs = np.zeros((32, 32), np.float32)
    for j in range(2):
        for c in range(16):
            WMUs[16 * j + c, :] = fcmu_s[:, c * 2 + j]

    # ---- classifier head ----
    fc1 = f(raw["cls_fc1_w"])                       # (128, 64)
    Wc1a = fc1[:, :32].T.copy()                     # (32, 128)
    Wc1b = fc1[:, 32:].T.copy()
    fc2 = f(raw["cls_fc2_w"])                       # (num_classes, 128)
    nc = fc2.shape[0]
    Wc2p = np.zeros((128, 128), np.float32)
    Wc2p[:, :nc] = fc2.T

    # ---- pack bf16 weight slab (16-row-aligned sections) ----
    sections = [("W1i", W1i), ("S2i", S2i), ("W2i", W2i), ("WMUi", WMUi),
                ("PPi", PPi), ("W1s", W1s), ("S2s", S2s), ("W2s", W2s),
                ("WMUs", WMUs), ("PPs", PPs),
                ("Wc1a", Wc1a), ("Wc1b", Wc1b), ("Wc2p", Wc2p)]
    layout, off = {}, 0
    for name, arr in sections:
        r, c = arr.shape
        layout[name] = (off, r, c)
        off = _round16(off + r)
    wslab = np.zeros((off, 128), np.float32)
    for name, arr in sections:
        o, r, c = layout[name]
        wslab[o:o + r, :c] = arr

    # ---- pack f32 bias slab, one bias per row ----
    bslab = np.zeros((8, 128), np.float32)
    bslab[0, :8] = f(raw["img_conv1_b"])
    bslab[1, :8] = f(raw["sig_conv1_b"])
    bslab[2, :16] = f(raw["img_conv2_b"])
    bslab[3, :16] = f(raw["sig_conv2_b"])
    bslab[4, :32] = f(raw["img_fc_mu_b"])
    bslab[5, :32] = f(raw["sig_fc_mu_b"])
    bslab[6, :128] = f(raw["cls_fc1_b"])
    bslab[7, :nc] = f(raw["cls_fc2_b"])

    return jnp.asarray(wslab, jnp.bfloat16), jnp.asarray(bslab, jnp.float32), layout


# ----------------------------- parameter init -------------------------------

def init_raw_params(key, *, n_latents=32, hidden_dim=128, num_classes=3):
    ks = jax.random.split(key, 16)
    nrm = lambda k, shape, s=0.1: s * jax.random.normal(k, shape, jnp.float32)
    return {
        # image encoder (frozen): Conv2d(4->8,k3,s2,p1), Conv2d(8->16,k3,s2,p1)
        "img_conv1_w": nrm(ks[0], (8, 4, 3, 3)),
        "img_conv1_b": nrm(ks[1], (8,)),
        "img_conv2_w": nrm(ks[2], (16, 8, 3, 3)),
        "img_conv2_b": nrm(ks[3], (16,)),
        "img_fc_mu_w": nrm(ks[4], (n_latents, 16 * 2 * 2)),   # (out, in)
        "img_fc_mu_b": nrm(ks[5], (n_latents,)),
        # signal encoder (frozen): Conv1d(1->8,k7,s2,p3), Conv1d(8->16,k7,s2,p3)
        "sig_conv1_w": nrm(ks[6], (8, 1, 7)),
        "sig_conv1_b": nrm(ks[7], (8,)),
        "sig_conv2_w": nrm(ks[8], (16, 8, 7)),
        "sig_conv2_b": nrm(ks[9], (16,)),
        "sig_fc_mu_w": nrm(ks[10], (n_latents, 16 * 2)),
        "sig_fc_mu_b": nrm(ks[11], (n_latents,)),
        # classifier: Linear(2*n_latents, hidden) -> ReLU -> Dropout -> Linear
        "cls_fc1_w": nrm(ks[12], (hidden_dim, 2 * n_latents)),
        "cls_fc1_b": nrm(ks[13], (hidden_dim,)),
        "cls_fc2_w": nrm(ks[14], (num_classes, hidden_dim)),
        "cls_fc2_b": nrm(ks[15], (num_classes,)),
    }


# ------------------------- numpy reference (host) ---------------------------

def _np_conv2d(x, w, b, stride, pad):
    B, Cin, H, W = x.shape
    Cout, _, k, _ = w.shape
    xp = np.pad(x, ((0, 0), (0, 0), (pad, pad), (pad, pad)))
    Ho = (H + 2 * pad - k) // stride + 1
    Wo = (W + 2 * pad - k) // stride + 1
    y = np.zeros((B, Cout, Ho, Wo), np.float32)
    for ho in range(Ho):
        for wo in range(Wo):
            patch = xp[:, :, ho * stride:ho * stride + k, wo * stride:wo * stride + k]
            y[:, :, ho, wo] = np.einsum('bikl,oikl->bo', patch, w) + b
    return y


def _np_conv1d(x, w, b, stride, pad):
    B, Cin, L = x.shape
    Cout, _, k = w.shape
    xp = np.pad(x, ((0, 0), (0, 0), (pad, pad)))
    Lo = (L + 2 * pad - k) // stride + 1
    y = np.zeros((B, Cout, Lo), np.float32)
    for lo in range(Lo):
        patch = xp[:, :, lo * stride:lo * stride + k]
        y[:, :, lo] = np.einsum('bik,oik->bo', patch, w) + b
    return y


def reference_forward(image, signal, raw):
    x = np.maximum(_np_conv2d(image, raw["img_conv1_w"], raw["img_conv1_b"], 2, 1), 0.0)
    x = np.maximum(_np_conv2d(x, raw["img_conv2_w"], raw["img_conv2_b"], 2, 1), 0.0)
    B, C, H, W = x.shape
    x = x.reshape(B, C, 2, H // 2, 2, W // 2).mean(axis=(3, 5)).reshape(B, -1)
    mu_i = x @ raw["img_fc_mu_w"].T + raw["img_fc_mu_b"]

    s = np.maximum(_np_conv1d(signal, raw["sig_conv1_w"], raw["sig_conv1_b"], 2, 3), 0.0)
    s = np.maximum(_np_conv1d(s, raw["sig_conv2_w"], raw["sig_conv2_b"], 2, 3), 0.0)
    B, C, L = s.shape
    s = s.reshape(B, C, 2, L // 2).mean(axis=3).reshape(B, -1)
    mu_s = s @ raw["sig_fc_mu_w"].T + raw["sig_fc_mu_b"]

    comb = np.concatenate([mu_i, mu_s], axis=1)
    h = np.maximum(comb @ raw["cls_fc1_w"].T + raw["cls_fc1_b"], 0.0)
    return h @ raw["cls_fc2_w"].T + raw["cls_fc2_b"]


def _bf16_round(x):
    return np.asarray(jnp.asarray(np.asarray(x, np.float32), jnp.bfloat16)
                      .astype(jnp.float32))


# ------------------------------------ main -----------------------------------

if __name__ == "__main__":
    key = jax.random.PRNGKey(0)
    k_img, k_sig, k_par = jax.random.split(key, 3)

    B, num_classes = 2, 3
    image = jax.random.normal(k_img, (B, 4, 16, 16), jnp.float32)   # NCHW
    signal = jax.random.normal(k_sig, (B, 1, 16), jnp.float32)      # NCL

    raw = init_raw_params(k_par, n_latents=32, hidden_dim=128,
                          num_classes=num_classes)
    wslab, bslab, layout = prepare_params(raw)
    forward = build_forward(layout, num_classes=num_classes)

    logits = jax.block_until_ready(forward(image, signal, wslab, bslab))
    assert logits.shape == (B, num_classes) and logits.dtype == jnp.float32

    # Correctness check: layer-by-layer numpy reference with bf16-rounded
    # weights (biases stay f32) to match the kernel's bf16 weight slab; the
    # tolerance covers the in-kernel bf16 activation casts (~few e-3).
    raw_np = {k: np.asarray(v) for k, v in raw.items()}
    raw_ref = {k: (_bf16_round(v) if k.endswith("_w") else v)
               for k, v in raw_np.items()}
    ref = reference_forward(np.asarray(image), np.asarray(signal), raw_ref)
    err = float(np.abs(np.asarray(logits) - ref).max())
    assert np.allclose(np.asarray(logits), ref, rtol=3e-2, atol=5e-3), err

    print("KERNEL_OK")
</pallas_src>

<mosaic_0001>
module attributes {stable_mosaic.version = 11 : i64} {
  func.func @kernel(%arg0: i32, %arg1: memref<1x64x36xf32, #tpu.memory_space<vmem>>, %arg2: memref<1x8x7xf32, #tpu.memory_space<vmem>>, %arg3: memref<848x128xbf16, #tpu.memory_space<vmem>>, %arg4: memref<8x128xf32, #tpu.memory_space<vmem>>, %arg5: memref<1x1x128xf32, #tpu.memory_space<vmem>>) attributes {dimension_semantics = [#tpu.dimension_semantics<parallel>], iteration_bounds = array<i64: 2>, scalar_prefetch = 0 : i64, scratch_operands = 0 : i64, tpu.core_type = #tpu.core_type<tc>, window_params = [{transform_indices = @transform_0, window_bounds = array<i64: 1, 64, 36>}, {transform_indices = @transform_1, window_bounds = array<i64: 1, 8, 7>}, {pipeline_mode = #tpu.pipeline_mode<synchronous>, transform_indices = @transform_2, window_bounds = array<i64: 848, 128>}, {pipeline_mode = #tpu.pipeline_mode<synchronous>, transform_indices = @transform_3, window_bounds = array<i64: 8, 128>}, {transform_indices = @transform_4, window_bounds = array<i64: 1, 1, 128>}]} {
    %c0 = arith.constant 0 : index
    %c0_0 = arith.constant 0 : index
    %c0_1 = arith.constant 0 : index
    %0 = vector.load %arg1[%c0, %c0_0, %c0_1] : memref<1x64x36xf32, #tpu.memory_space<vmem>>, vector<1x64x36xf32>
    %1 = vector.shape_cast %0 : vector<1x64x36xf32> to vector<64x36xf32>
    %2 = arith.truncf %1 : vector<64x36xf32> to vector<64x36xbf16>
    %c0_2 = arith.constant 0 : index
    %c0_3 = arith.constant 0 : index
    %3 = vector.load %arg3[%c0_2, %c0_3] : memref<848x128xbf16, #tpu.memory_space<vmem>>, vector<36x128xbf16>
    %4 = vector.extract_strided_slice %3 {offsets = [0, 0], sizes = [36, 16], strides = [1, 1]} : vector<36x128xbf16> to vector<36x16xbf16>
    %cst = arith.constant dense<0.000000e+00> : vector<64x16xf32>
    %5 = tpu.matmul %2, %4, %cst {dimension_numbers = #tpu.dot_dimension_numbers<[1], [0], [0], [1], [0, 0, 1, 1], [], []>} : vector<64x36xbf16>, vector<36x16xbf16>, vector<64x16xf32> -> vector<64x16xf32>
    %c0_4 = arith.constant 0 : index
    %c0_5 = arith.constant 0 : index
    %6 = vector.load %arg4[%c0_4, %c0_5] : memref<8x128xf32, #tpu.memory_space<vmem>>, vector<1x128xf32>
    %7 = vector.extract_strided_slice %6 {offsets = [0, 0], sizes = [1, 16], strides = [1, 1]} : vector<1x128xf32> to vector<1x16xf32>
    %8 = vector.broadcast %7 : vector<1x16xf32> to vector<64x16xf32>
    %9 = arith.addf %5, %8 : vector<64x16xf32>
    %cst_6 = arith.constant 0.000000e+00 : f32
    %10 = vector.broadcast %cst_6 : f32 to vector<64x16xf32>
    %11 = arith.maximumf %9, %10 : vector<64x16xf32>
    %c48 = arith.constant 48 : index
    %c0_7 = arith.constant 0 : index
    %12 = vector.load %arg3[%c48, %c0_7] : memref<848x128xbf16, #tpu.memory_space<vmem>>, vector<144x128xbf16>
    %13 = vector.extract_strided_slice %12 {offsets = [0, 0], sizes = [144, 64], strides = [1, 1]} : vector<144x128xbf16> to vector<144x64xbf16>
    %14 = arith.truncf %11 : vector<64x16xf32> to vector<64x16xbf16>
    %cst_8 = arith.constant dense<0.000000e+00> : vector<144x16xf32>
    %15 = tpu.matmul %13, %14, %cst_8 {dimension_numbers = #tpu.dot_dimension_numbers<[1], [0], [0], [1], [0, 0, 1, 1], [], []>} : vector<144x64xbf16>, vector<64x16xbf16>, vector<144x16xf32> -> vector<144x16xf32>
    %c192 = arith.constant 192 : index
    %c0_9 = arith.constant 0 : index
    %16 = vector.load %arg3[%c192, %c0_9] : memref<848x128xbf16, #tpu.memory_space<vmem>>, vector<144x128xbf16>
    %17 = vector.extract_strided_slice %16 {offsets = [0, 0], sizes = [144, 16], strides = [1, 1]} : vector<144x128xbf16> to vector<144x16xbf16>
    %cst_10 = arith.constant 0.000000e+00 : f32
    %18 = vector.broadcast %cst_10 : f32 to vector<16x16xf32>
    %19 = vector.extract_strided_slice %15 {offsets = [0, 0], sizes = [16, 16], strides = [1, 1]} : vector<144x16xf32> to vector<16x16xf32>
    %20 = arith.truncf %19 : vector<16x16xf32> to vector<16x16xbf16>
    %21 = vector.extract_strided_slice %17 {offsets = [0, 0], sizes = [16, 16], strides = [1, 1]} : vector<144x16xbf16> to vector<16x16xbf16>
    %cst_11 = arith.constant dense<0.000000e+00> : vector<16x16xf32>
    %22 = tpu.matmul %20, %21, %cst_11 {dimension_numbers = #tpu.dot_dimension_numbers<[1], [0], [0], [1], [0, 0, 1, 1], [], []>} : vector<16x16xbf16>, vector<16x16xbf16>, vector<16x16xf32> -> vector<16x16xf32>
    %23 = arith.addf %18, %22 : vector<16x16xf32>
    %24 = vector.extract_strided_slice %15 {offsets = [16, 0], sizes = [16, 16], strides = [1, 1]} : vector<144x16xf32> to vector<16x16xf32>
    %25 = arith.truncf %24 : vector<16x16xf32> to vector<16x16xbf16>
    %26 = vector.extract_strided_slice %17 {offsets = [16, 0], sizes = [16, 16], strides = [1, 1]} : vector<144x16xbf16> to vector<16x16xbf16>
    %cst_12 = arith.constant dense<0.000000e+00> : vector<16x16xf32>
    %27 = tpu.matmul %25, %26, %cst_12 {dimension_numbers = #tpu.dot_dimension_numbers<[1], [0], [0], [1], [0, 0, 1, 1], [], []>} : vector<16x16xbf16>, vector<16x16xbf16>, vector<16x16xf32> -> vector<16x16xf32>
    %28 = arith.addf %23, %27 : vector<16x16xf32>
    %29 = vector.extract_strided_slice %15 {offsets = [32, 0], sizes = [16, 16], strides = [1, 1]} : vector<144x16xf32> to vector<16x16xf32>
    %30 = arith.truncf %29 : vector<16x16xf32> to vector<16x16xbf16>
    %31 = vector.extract_strided_slice %17 {offsets = [32, 0], sizes = [16, 16], strides = [1, 1]} : vector<144x16xbf16> to vector<16x16xbf16>
    %cst_13 = arith.constant dense<0.000000e+00> : vector<16x16xf32>
    %32 = tpu.matmul %30, %31, %cst_13 {dimension_numbers = #tpu.dot_dimension_numbers<[1], [0], [0], [1], [0, 0, 1, 1], [], []>} : vector<16x16xbf16>, vector<16x16xbf16>, vector<16x16xf32> -> vector<16x16xf32>
    %33 = arith.addf %28, %32 : vector<16x16xf32>
    %34 = vector.extract_strided_slice %15 {offsets = [48, 0], sizes = [16, 16], strides = [1, 1]} : vector<144x16xf32> to vector<16x16xf32>
    %35 = arith.truncf %34 : vector<16x16xf32> to vector<16x16xbf16>
    %36 = vector.extract_strided_slice %17 {offsets = [48, 0], sizes = [16, 16], strides = [1, 1]} : vector<144x16xbf16> to vector<16x16xbf16>
    %cst_14 = arith.constant dense<0.000000e+00> : vector<16x16xf32>
    %37 = tpu.matmul %35, %36, %cst_14 {dimension_numbers = #tpu.dot_dimension_numbers<[1], [0], [0], [1], [0, 0, 1, 1], [], []>} : vector<16x16xbf16>, vector<16x16xbf16>, vector<16x16xf32> -> vector<16x16xf32>
    %38 = arith.addf %33, %37 : vector<16x16xf32>
    %39 = vector.extract_strided_slice %15 {offsets = [64, 0], sizes = [16, 16], strides = [1, 1]} : vector<144x16xf32> to vector<16x16xf32>
    %40 = arith.truncf %39 : vector<16x16xf32> to vector<16x16xbf16>
    %41 = vector.extract_strided_slice %17 {offsets = [64, 0], sizes = [16, 16], strides = [1, 1]} : vector<144x16xbf16> to vector<16x16xbf16>
    %cst_15 = arith.constant dense<0.000000e+00> : vector<16x16xf32>
    %42 = tpu.matmul %40, %41, %cst_15 {dimension_numbers = #tpu.dot_dimension_numbers<[1], [0], [0], [1], [0, 0, 1, 1], [], []>} : vector<16x16xbf16>, vector<16x16xbf16>, vector<16x16xf32> -> vector<16x16xf32>
    %43 = arith.addf %38, %42 : vector<16x16xf32>
    %44 = vector.extract_strided_slice %15 {offsets = [80, 0], sizes = [16, 16], strides = [1, 1]} : vector<144x16xf32> to vector<16x16xf32>
    %45 = arith.truncf %44 : vector<16x16xf32> to vector<16x16xbf16>
    %46 = vector.extract_strided_slice %17 {offsets = [80, 0], sizes = [16, 16], strides = [1, 1]} : vector<144x16xbf16> to vector<16x16xbf16>
    %cst_16 = arith.constant dense<0.000000e+00> : vector<16x16xf32>
    %47 = tpu.matmul %45, %46, %cst_16 {dimension_numbers = #tpu.dot_dimension_numbers<[1], [0], [0], [1], [0, 0, 1, 1], [], []>} : vector<16x16xbf16>, vector<16x16xbf16>, vector<16x16xf32> -> vector<16x16xf32>
    %48 = arith.addf %43, %47 : vector<16x16xf32>
    %49 = vector.extract_strided_slice %15 {offsets = [96, 0], sizes = [16, 16], strides = [1, 1]} : vector<144x16xf32> to vector<16x16xf32>
    %50 = arith.truncf %49 : vector<16x16xf32> to vector<16x16xbf16>
    %51 = vector.extract_strided_slice %17 {offsets = [96, 0], sizes = [16, 16], strides = [1, 1]} : vector<144x16xbf16> to vector<16x16xbf16>
    %cst_17 = arith.constant dense<0.000000e+00> : vector<16x16xf32>
    %52 = tpu.matmul %50, %51, %cst_17 {dimension_numbers = #tpu.dot_dimension_numbers<[1], [0], [0], [1], [0, 0, 1, 1], [], []>} : vector<16x16xbf16>, vector<16x16xbf16>, vector<16x16xf32> -> vector<16x16xf32>
    %53 = arith.addf %48, %52 : vector<16x16xf32>
    %54 = vector.extract_strided_slice %15 {offsets = [112, 0], sizes = [16, 16], strides = [1, 1]} : vector<144x16xf32> to vector<16x16xf32>
    %55 = arith.truncf %54 : vector<16x16xf32> to vector<16x16xbf16>
    %56 = vector.extract_strided_slice %17 {offsets = [112, 0], sizes = [16, 16], strides = [1, 1]} : vector<144x16xbf16> to vector<16x16xbf16>
    %cst_18 = arith.constant dense<0.000000e+00> : vector<16x16xf32>
    %57 = tpu.matmul %55, %56, %cst_18 {dimension_numbers = #tpu.dot_dimension_numbers<[1], [0], [0], [1], [0, 0, 1, 1], [], []>} : vector<16x16xbf16>, vector<16x16xbf16>, vector<16x16xf32> -> vector<16x16xf32>
    %58 = arith.addf %53, %57 : vector<16x16xf32>
    %59 = vector.extract_strided_slice %15 {offsets = [128, 0], sizes = [16, 16], strides = [1, 1]} : vector<144x16xf32> to vector<16x16xf32>
    %60 = arith.truncf %59 : vector<16x16xf32> to vector<16x16xbf16>
    %61 = vector.extract_strided_slice %17 {offsets = [128, 0], sizes = [16, 16], strides = [1, 1]} : vector<144x16xbf16> to vector<16x16xbf16>
    %cst_19 = arith.constant dense<0.000000e+00> : vector<16x16xf32>
    %62 = tpu.matmul %60, %61, %cst_19 {dimension_numbers = #tpu.dot_dimension_numbers<[1], [0], [0], [1], [0, 0, 1, 1], [], []>} : vector<16x16xbf16>, vector<16x16xbf16>, vector<16x16xf32> -> vector<16x16xf32>
    %63 = arith.addf %58, %62 : vector<16x16xf32>
    %c2 = arith.constant 2 : index
    %c0_20 = arith.constant 0 : index
    %64 = vector.load %arg4[%c2, %c0_20] : memref<8x128xf32, #tpu.memory_space<vmem>>, vector<1x128xf32>
    %65 = vector.extract_strided_slice %64 {offsets = [0, 0], sizes = [1, 16], strides = [1, 1]} : vector<1x128xf32> to vector<1x16xf32>
    %66 = vector.broadcast %65 : vector<1x16xf32> to vector<16x16xf32>
    %67 = arith.addf %63, %66 : vector<16x16xf32>
    %cst_21 = arith.constant 0.000000e+00 : f32
    %68 = vector.broadcast %cst_21 : f32 to vector<16x16xf32>
    %69 = arith.maximumf %67, %68 : vector<16x16xf32>
    %c400 = arith.constant 400 : index
    %c0_22 = arith.constant 0 : index
    %70 = vector.load %arg3[%c400, %c0_22] : memref<848x128xbf16, #tpu.memory_space<vmem>>, vector<4x128xbf16>
    %71 = vector.extract_strided_slice %70 {offsets = [0, 0], sizes = [4, 16], strides = [1, 1]} : vector<4x128xbf16> to vector<4x16xbf16>
    %72 = arith.truncf %69 : vector<16x16xf32> to vector<16x16xbf16>
    %cst_23 = arith.constant dense<0.000000e+00> : vector<4x16xf32>
    %73 = tpu.matmul %71, %72, %cst_23 {dimension_numbers = #tpu.dot_dimension_numbers<[1], [0], [0], [1], [0, 0, 1, 1], [], []>} : vector<4x16xbf16>, vector<16x16xbf16>, vector<4x16xf32> -> vector<4x16xf32>
    %c336 = arith.constant 336 : index
    %c0_24 = arith.constant 0 : index
    %74 = vector.load %arg3[%c336, %c0_24] : memref<848x128xbf16, #tpu.memory_space<vmem>>, vector<64x128xbf16>
    %75 = vector.extract_strided_slice %74 {offsets = [0, 0], sizes = [64, 32], strides = [1, 1]} : vector<64x128xbf16> to vector<64x32xbf16>
    %c4 = arith.constant 4 : index
    %c0_25 = arith.constant 0 : index
    %76 = vector.load %arg4[%c4, %c0_25] : memref<8x128xf32, #tpu.memory_space<vmem>>, vector<1x128xf32>
    %77 = vector.extract_strided_slice %76 {offsets = [0, 0], sizes = [1, 32], strides = [1, 1]} : vector<1x128xf32> to vector<1x32xf32>
    %78 = vector.extract_strided_slice %73 {offsets = [0, 0], sizes = [1, 16], strides = [1, 1]} : vector<4x16xf32> to vector<1x16xf32>
    %79 = arith.truncf %78 : vector<1x16xf32> to vector<1x16xbf16>
    %80 = vector.extract_strided_slice %75 {offsets = [0, 0], sizes = [16, 32], strides = [1, 1]} : vector<64x32xbf16> to vector<16x32xbf16>
    %cst_26 = arith.constant dense<0.000000e+00> : vector<1x32xf32>
    %81 = tpu.matmul %79, %80, %cst_26 {dimension_numbers = #tpu.dot_dimension_numbers<[1], [0], [0], [1], [0, 0, 1, 1], [], []>} : vector<1x16xbf16>, vector<16x32xbf16>, vector<1x32xf32> -> vector<1x32xf32>
    %82 = arith.addf %77, %81 : vector<1x32xf32>
    %83 = vector.extract_strided_slice %73 {offsets = [1, 0], sizes = [1, 16], strides = [1, 1]} : vector<4x16xf32> to vector<1x16xf32>
    %84 = arith.truncf %83 : vector<1x16xf32> to vector<1x16xbf16>
    %85 = vector.extract_strided_slice %75 {offsets = [16, 0], sizes = [16, 32], strides = [1, 1]} : vector<64x32xbf16> to vector<16x32xbf16>
    %cst_27 = arith.constant dense<0.000000e+00> : vector<1x32xf32>
    %86 = tpu.matmul %84, %85, %cst_27 {dimension_numbers = #tpu.dot_dimension_numbers<[1], [0], [0], [1], [0, 0, 1, 1], [], []>} : vector<1x16xbf16>, vector<16x32xbf16>, vector<1x32xf32> -> vector<1x32xf32>
    %87 = arith.addf %82, %86 : vector<1x32xf32>
    %88 = vector.extract_strided_slice %73 {offsets = [2, 0], sizes = [1, 16], strides = [1, 1]} : vector<4x16xf32> to vector<1x16xf32>
    %89 = arith.truncf %88 : vector<1x16xf32> to vector<1x16xbf16>
    %90 = vector.extract_strided_slice %75 {offsets = [32, 0], sizes = [16, 32], strides = [1, 1]} : vector<64x32xbf16> to vector<16x32xbf16>
    %cst_28 = arith.constant dense<0.000000e+00> : vector<1x32xf32>
    %91 = tpu.matmul %89, %90, %cst_28 {dimension_numbers = #tpu.dot_dimension_numbers<[1], [0], [0], [1], [0, 0, 1, 1], [], []>} : vector<1x16xbf16>, vector<16x32xbf16>, vector<1x32xf32> -> vector<1x32xf32>
    %92 = arith.addf %87, %91 : vector<1x32xf32>
    %93 = vector.extract_strided_slice %73 {offsets = [3, 0], sizes = [1, 16], strides = [1, 1]} : vector<4x16xf32> to vector<1x16xf32>
    %94 = arith.truncf %93 : vector<1x16xf32> to vector<1x16xbf16>
    %95 = vector.extract_strided_slice %75 {offsets = [48, 0], sizes = [16, 32], strides = [1, 1]} : vector<64x32xbf16> to vector<16x32xbf16>
    %cst_29 = arith.constant dense<0.000000e+00> : vector<1x32xf32>
    %96 = tpu.matmul %94, %95, %cst_29 {dimension_numbers = #tpu.dot_dimension_numbers<[1], [0], [0], [1], [0, 0, 1, 1], [], []>} : vector<1x16xbf16>, vector<16x32xbf16>, vector<1x32xf32> -> vector<1x32xf32>
    %97 = arith.addf %92, %96 : vector<1x32xf32>
    %c0_30 = arith.constant 0 : index
    %c0_31 = arith.constant 0 : index
    %c0_32 = arith.constant 0 : index
    %98 = vector.load %arg2[%c0_30, %c0_31, %c0_32] : memref<1x8x7xf32, #tpu.memory_space<vmem>>, vector<1x8x7xf32>
    %99 = vector.shape_cast %98 : vector<1x8x7xf32> to vector<8x7xf32>
    %100 = arith.truncf %99 : vector<8x7xf32> to vector<8x7xbf16>
    %c416 = arith.constant 416 : index
    %c0_33 = arith.constant 0 : index
    %101 = vector.load %arg3[%c416, %c0_33] : memref<848x128xbf16, #tpu.memory_space<vmem>>, vector<7x128xbf16>
    %102 = vector.extract_strided_slice %101 {offsets = [0, 0], sizes = [7, 16], strides = [1, 1]} : vector<7x128xbf16> to vector<7x16xbf16>
    %cst_34 = arith.constant dense<0.000000e+00> : vector<8x16xf32>
    %103 = tpu.matmul %100, %102, %cst_34 {dimension_numbers = #tpu.dot_dimension_numbers<[1], [0], [0], [1], [0, 0, 1, 1], [], []>} : vector<8x7xbf16>, vector<7x16xbf16>, vector<8x16xf32> -> vector<8x16xf32>
    %c1 = arith.constant 1 : index
    %c0_35 = arith.constant 0 : index
    %104 = vector.load %arg4[%c1, %c0_35] : memref<8x128xf32, #tpu.memory_space<vmem>>, vector<1x128xf32>
    %105 = vector.extract_strided_slice %104 {offsets = [0, 0], sizes = [1, 16], strides = [1, 1]} : vector<1x128xf32> to vector<1x16xf32>
    %106 = vector.broadcast %105 : vector<1x16xf32> to vector<8x16xf32>
    %107 = arith.addf %103, %106 : vector<8x16xf32>
    %cst_36 = arith.constant 0.000000e+00 : f32
    %108 = vector.broadcast %cst_36 : f32 to vector<8x16xf32>
    %109 = arith.maximumf %107, %108 : vector<8x16xf32>
    %c432 = arith.constant 432 : index
    %c0_37 = arith.constant 0 : index
    %110 = vector.load %arg3[%c432, %c0_37] : memref<848x128xbf16, #tpu.memory_space<vmem>>, vector<56x128xbf16>
    %111 = vector.extract_strided_slice %110 {offsets = [0, 0], sizes = [56, 8], strides = [1, 1]} : vector<56x128xbf16> to vector<56x8xbf16>
    %112 = arith.truncf %109 : vector<8x16xf32> to vector<8x16xbf16>
    %cst_38 = arith.constant dense<0.000000e+00> : vector<56x16xf32>
    %113 = tpu.matmul %111, %112, %cst_38 {dimension_numbers = #tpu.dot_dimension_numbers<[1], [0], [0], [1], [0, 0, 1, 1], [], []>} : vector<56x8xbf16>, vector<8x16xbf16>, vector<56x16xf32> -> vector<56x16xf32>
    %c496 = arith.constant 496 : index
    %c0_39 = arith.constant 0 : index
    %114 = vector.load %arg3[%c496, %c0_39] : memref<848x128xbf16, #tpu.memory_space<vmem>>, vector<112x128xbf16>
    %115 = vector.extract_strided_slice %114 {offsets = [0, 0], sizes = [112, 16], strides = [1, 1]} : vector<112x128xbf16> to vector<112x16xbf16>
    %cst_40 = arith.constant 0.000000e+00 : f32
    %116 = vector.broadcast %cst_40 : f32 to vector<8x16xf32>
    %117 = vector.extract_strided_slice %113 {offsets = [0, 0], sizes = [8, 16], strides = [1, 1]} : vector<56x16xf32> to vector<8x16xf32>
    %118 = arith.truncf %117 : vector<8x16xf32> to vector<8x16xbf16>
    %119 = vector.extract_strided_slice %115 {offsets = [0, 0], sizes = [16, 16], strides = [1, 1]} : vector<112x16xbf16> to vector<16x16xbf16>
    %cst_41 = arith.constant dense<0.000000e+00> : vector<8x16xf32>
    %120 = tpu.matmul %118, %119, %cst_41 {dimension_numbers = #tpu.dot_dimension_numbers<[1], [0], [0], [1], [0, 0, 1, 1], [], []>} : vector<8x16xbf16>, vector<16x16xbf16>, vector<8x16xf32> -> vector<8x16xf32>
    %121 = arith.addf %116, %120 : vector<8x16xf32>
    %122 = vector.extract_strided_slice %113 {offsets = [8, 0], sizes = [8, 16], strides = [1, 1]} : vector<56x16xf32> to vector<8x16xf32>
    %123 = arith.truncf %122 : vector<8x16xf32> to vector<8x16xbf16>
    %124 = vector.extract_strided_slice %115 {offsets = [16, 0], sizes = [16, 16], strides = [1, 1]} : vector<112x16xbf16> to vector<16x16xbf16>
    %cst_42 = arith.constant dense<0.000000e+00> : vector<8x16xf32>
    %125 = tpu.matmul %123, %124, %cst_42 {dimension_numbers = #tpu.dot_dimension_numbers<[1], [0], [0], [1], [0, 0, 1, 1], [], []>} : vector<8x16xbf16>, vector<16x16xbf16>, vector<8x16xf32> -> vector<8x16xf32>
    %126 = arith.addf %121, %125 : vector<8x16xf32>
    %127 = vector.extract_strided_slice %113 {offsets = [16, 0], sizes = [8, 16], strides = [1, 1]} : vector<56x16xf32> to vector<8x16xf32>
    %128 = arith.truncf %127 : vector<8x16xf32> to vector<8x16xbf16>
    %129 = vector.extract_strided_slice %115 {offsets = [32, 0], sizes = [16, 16], strides = [1, 1]} : vector<112x16xbf16> to vector<16x16xbf16>
    %cst_43 = arith.constant dense<0.000000e+00> : vector<8x16xf32>
    %130 = tpu.matmul %128, %129, %cst_43 {dimension_numbers = #tpu.dot_dimension_numbers<[1], [0], [0], [1], [0, 0, 1, 1], [], []>} : vector<8x16xbf16>, vector<16x16xbf16>, vector<8x16xf32> -> vector<8x16xf32>
    %131 = arith.addf %126, %130 : vector<8x16xf32>
    %132 = vector.extract_strided_slice %113 {offsets = [24, 0], sizes = [8, 16], strides = [1, 1]} : vector<56x16xf32> to vector<8x16xf32>
    %133 = arith.truncf %132 : vector<8x16xf32> to vector<8x16xbf16>
    %134 = vector.extract_strided_slice %115 {offsets = [48, 0], sizes = [16, 16], strides = [1, 1]} : vector<112x16xbf16> to vector<16x16xbf16>
    %cst_44 = arith.constant dense<0.000000e+00> : vector<8x16xf32>
    %135 = tpu.matmul %133, %134, %cst_44 {dimension_numbers = #tpu.dot_dimension_numbers<[1], [0], [0], [1], [0, 0, 1, 1], [], []>} : vector<8x16xbf16>, vector<16x16xbf16>, vector<8x16xf32> -> vector<8x16xf32>
    %136 = arith.addf %131, %135 : vector<8x16xf32>
    %137 = vector.extract_strided_slice %113 {offsets = [32, 0], sizes = [8, 16], strides = [1, 1]} : vector<56x16xf32> to vector<8x16xf32>
    %138 = arith.truncf %137 : vector<8x16xf32> to vector<8x16xbf16>
    %139 = vector.extract_strided_slice %115 {offsets = [64, 0], sizes = [16, 16], strides = [1, 1]} : vector<112x16xbf16> to vector<16x16xbf16>
    %cst_45 = arith.constant dense<0.000000e+00> : vector<8x16xf32>
    %140 = tpu.matmul %138, %139, %cst_45 {dimension_numbers = #tpu.dot_dimension_numbers<[1], [0], [0], [1], [0, 0, 1, 1], [], []>} : vector<8x16xbf16>, vector<16x16xbf16>, vector<8x16xf32> -> vector<8x16xf32>
    %141 = arith.addf %136, %140 : vector<8x16xf32>
    %142 = vector.extract_strided_slice %113 {offsets = [40, 0], sizes = [8, 16], strides = [1, 1]} : vector<56x16xf32> to vector<8x16xf32>
    %143 = arith.truncf %142 : vector<8x16xf32> to vector<8x16xbf16>
    %144 = vector.extract_strided_slice %115 {offsets = [80, 0], sizes = [16, 16], strides = [1, 1]} : vector<112x16xbf16> to vector<16x16xbf16>
    %cst_46 = arith.constant dense<0.000000e+00> : vector<8x16xf32>
    %145 = tpu.matmul %143, %144, %cst_46 {dimension_numbers = #tpu.dot_dimension_numbers<[1], [0], [0], [1], [0, 0, 1, 1], [], []>} : vector<8x16xbf16>, vector<16x16xbf16>, vector<8x16xf32> -> vector<8x16xf32>
    %146 = arith.addf %141, %145 : vector<8x16xf32>
    %147 = vector.extract_strided_slice %113 {offsets = [48, 0], sizes = [8, 16], strides = [1, 1]} : vector<56x16xf32> to vector<8x16xf32>
    %148 = arith.truncf %147 : vector<8x16xf32> to vector<8x16xbf16>
    %149 = vector.extract_strided_slice %115 {offsets = [96, 0], sizes = [16, 16], strides = [1, 1]} : vector<112x16xbf16> to vector<16x16xbf16>
    %cst_47 = arith.constant dense<0.000000e+00> : vector<8x16xf32>
    %150 = tpu.matmul %148, %149, %cst_47 {dimension_numbers = #tpu.dot_dimension_numbers<[1], [0], [0], [1], [0, 0, 1, 1], [], []>} : vector<8x16xbf16>, vector<16x16xbf16>, vector<8x16xf32> -> vector<8x16xf32>
    %151 = arith.addf %146, %150 : vector<8x16xf32>
    %c3 = arith.constant 3 : index
    %c0_48 = arith.constant 0 : index
    %152 = vector.load %arg4[%c3, %c0_48] : memref<8x128xf32, #tpu.memory_space<vmem>>, vector<1x128xf32>
    %153 = vector.extract_strided_slice %152 {offsets = [0, 0], sizes = [1, 16], strides = [1, 1]} : vector<1x128xf32> to vector<1x16xf32>
    %154 = vector.broadcast %153 : vector<1x16xf32> to vector<8x16xf32>
    %155 = arith.addf %151, %154 : vector<8x16xf32>
    %cst_49 = arith.constant 0.000000e+00 : f32
    %156 = vector.broadcast %cst_49 : f32 to vector<8x16xf32>
    %157 = arith.maximumf %155, %156 : vector<8x16xf32>
    %c640 = arith.constant 640 : index
    %c0_50 = arith.constant 0 : index
    %158 = vector.load %arg3[%c640, %c0_50] : memref<848x128xbf16, #tpu.memory_space<vmem>>, vector<2x128xbf16>
    %159 = vector.extract_strided_slice %158 {offsets = [0, 0], sizes = [2, 8], strides = [1, 1]} : vector<2x128xbf16> to vector<2x8xbf16>
    %160 = arith.truncf %157 : vector<8x16xf32> to vector<8x16xbf16>
    %cst_51 = arith.constant dense<0.000000e+00> : vector<2x16xf32>
    %161 = tpu.matmul %159, %160, %cst_51 {dimension_numbers = #tpu.dot_dimension_numbers<[1], [0], [0], [1], [0, 0, 1, 1], [], []>} : vector<2x8xbf16>, vector<8x16xbf16>, vector<2x16xf32> -> vector<2x16xf32>
    %c608 = arith.constant 608 : index
    %c0_52 = arith.constant 0 : index
    %162 = vector.load %arg3[%c608, %c0_52] : memref<848x128xbf16, #tpu.memory_space<vmem>>, vector<32x128xbf16>
    %163 = vector.extract_strided_slice %162 {offsets = [0, 0], sizes = [32, 32], strides = [1, 1]} : vector<32x128xbf16> to vector<32x32xbf16>
    %c5 = arith.constant 5 : index
    %c0_53 = arith.constant 0 : index
    %164 = vector.load %arg4[%c5, %c0_53] : memref<8x128xf32, #tpu.memory_space<vmem>>, vector<1x128xf32>
    %165 = vector.extract_strided_slice %164 {offsets = [0, 0], sizes = [1, 32], strides = [1, 1]} : vector<1x128xf32> to vector<1x32xf32>
    %166 = vector.extract_strided_slice %161 {offsets = [0, 0], sizes = [1, 16], strides = [1, 1]} : vector<2x16xf32> to vector<1x16xf32>
    %167 = arith.truncf %166 : vector<1x16xf32> to vector<1x16xbf16>
    %168 = vector.extract_strided_slice %163 {offsets = [0, 0], sizes = [16, 32], strides = [1, 1]} : vector<32x32xbf16> to vector<16x32xbf16>
    %cst_54 = arith.constant dense<0.000000e+00> : vector<1x32xf32>
    %169 = tpu.matmul %167, %168, %cst_54 {dimension_numbers = #tpu.dot_dimension_numbers<[1], [0], [0], [1], [0, 0, 1, 1], [], []>} : vector<1x16xbf16>, vector<16x32xbf16>, vector<1x32xf32> -> vector<1x32xf32>
    %170 = arith.addf %165, %169 : vector<1x32xf32>
    %171 = vector.extract_strided_slice %161 {offsets = [1, 0], sizes = [1, 16], strides = [1, 1]} : vector<2x16xf32> to vector<1x16xf32>
    %172 = arith.truncf %171 : vector<1x16xf32> to vector<1x16xbf16>
    %173 = vector.extract_strided_slice %163 {offsets = [16, 0], sizes = [16, 32], strides = [1, 1]} : vector<32x32xbf16> to vector<16x32xbf16>
    %cst_55 = arith.constant dense<0.000000e+00> : vector<1x32xf32>
    %174 = tpu.matmul %172, %173, %cst_55 {dimension_numbers = #tpu.dot_dimension_numbers<[1], [0], [0], [1], [0, 0, 1, 1], [], []>} : vector<1x16xbf16>, vector<16x32xbf16>, vector<1x32xf32> -> vector<1x32xf32>
    %175 = arith.addf %170, %174 : vector<1x32xf32>
    %176 = arith.truncf %97 : vector<1x32xf32> to vector<1x32xbf16>
    %c656 = arith.constant 656 : index
    %c0_56 = arith.constant 0 : index
    %177 = vector.load %arg3[%c656, %c0_56] : memref<848x128xbf16, #tpu.memory_space<vmem>>, vector<32x128xbf16>
    %cst_57 = arith.constant dense<0.000000e+00> : vector<1x128xf32>
    %178 = tpu.matmul %176, %177, %cst_57 {dimension_numbers = #tpu.dot_dimension_numbers<[1], [0], [0], [1], [0, 0, 1, 1], [], []>} : vector<1x32xbf16>, vector<32x128xbf16>, vector<1x128xf32> -> vector<1x128xf32>
    %179 = arith.truncf %175 : vector<1x32xf32> to vector<1x32xbf16>
    %c688 = arith.constant 688 : index
    %c0_58 = arith.constant 0 : index
    %180 = vector.load %arg3[%c688, %c0_58] : memref<848x128xbf16, #tpu.memory_space<vmem>>, vector<32x128xbf16>
    %cst_59 = arith.constant dense<0.000000e+00> : vector<1x128xf32>
    %181 = tpu.matmul %179, %180, %cst_59 {dimension_numbers = #tpu.dot_dimension_numbers<[1], [0], [0], [1], [0, 0, 1, 1], [], []>} : vector<1x32xbf16>, vector<32x128xbf16>, vector<1x128xf32> -> vector<1x128xf32>
    %182 = arith.addf %178, %181 : vector<1x128xf32>
    %c6 = arith.constant 6 : index
    %c0_60 = arith.constant 0 : index
    %183 = vector.load %arg4[%c6, %c0_60] : memref<8x128xf32, #tpu.memory_space<vmem>>, vector<1x128xf32>
    %184 = arith.addf %182, %183 : vector<1x128xf32>
    %cst_61 = arith.constant 0.000000e+00 : f32
    %185 = vector.broadcast %cst_61 : f32 to vector<1x128xf32>
    %186 = arith.maximumf %184, %185 : vector<1x128xf32>
    %187 = arith.truncf %186 : vector<1x128xf32> to vector<1x128xbf16>
    %c720 = arith.constant 720 : index
    %c0_62 = arith.constant 0 : index
    %188 = vector.load %arg3[%c720, %c0_62] : memref<848x128xbf16, #tpu.memory_space<vmem>>, vector<128x128xbf16>
    %cst_63 = arith.constant dense<0.000000e+00> : vector<1x128xf32>
    %189 = tpu.matmul %187, %188, %cst_63 {dimension_numbers = #tpu.dot_dimension_numbers<[1], [0], [0], [1], [0, 0, 1, 1], [], []>} : vector<1x128xbf16>, vector<128x128xbf16>, vector<1x128xf32> -> vector<1x128xf32>
    %c7 = arith.constant 7 : index
    %c0_64 = arith.constant 0 : index
    %190 = vector.load %arg4[%c7, %c0_64] : memref<8x128xf32, #tpu.memory_space<vmem>>, vector<1x128xf32>
    %191 = arith.addf %189, %190 : vector<1x128xf32>
    %c0_65 = arith.constant 0 : index
    %c0_66 = arith.constant 0 : index
    %c0_67 = arith.constant 0 : index
    %192 = vector.load %arg5[%c0_65, %c0_66, %c0_67] : memref<1x1x128xf32, #tpu.memory_space<vmem>>, vector<1x1x128xf32>
    %193 = vector.shape_cast %192 : vector<1x1x128xf32> to vector<1x128xf32>
    %194 = vector.shape_cast %191 : vector<1x128xf32> to vector<1x1x128xf32>
    tpu.vector_store %arg5[%c0_65, %c0_66, %c0_67], %194 {strides = array<i32>} : memref<1x1x128xf32, #tpu.memory_space<vmem>>, vector<1x1x128xf32>,
    return
  }
  func.func @transform_0(%arg0: i32) -> (i32, i32, i32) {
    %c0_i32 = arith.constant 0 : i32
    %c0_i32_0 = arith.constant 0 : i32
    %c0_i32_1 = arith.constant 0 : i32
    return %arg0, %c0_i32, %c0_i32_0 : i32, i32, i32
  }
  func.func @transform_1(%arg0: i32) -> (i32, i32, i32) {
    %c0_i32 = arith.constant 0 : i32
    %c0_i32_0 = arith.constant 0 : i32
    %c0_i32_1 = arith.constant 0 : i32
    return %arg0, %c0_i32, %c0_i32_0 : i32, i32, i32
  }
  func.func @transform_2(%arg0: i32) -> (i32, i32) {
    %c0_i32 = arith.constant 0 : i32
    %c0_i32_0 = arith.constant 0 : i32
    %c0_i32_1 = arith.constant 0 : i32
    return %c0_i32, %c0_i32_0 : i32, i32
  }
  func.func @transform_3(%arg0: i32) -> (i32, i32) {
    %c0_i32 = arith.constant 0 : i32
    %c0_i32_0 = arith.constant 0 : i32
    %c0_i32_1 = arith.constant 0 : i32
    return %c0_i32, %c0_i32_0 : i32, i32
  }
  func.func @transform_4(%arg0: i32) -> (i32, i32, i32) {
    %c0_i32 = arith.constant 0 : i32
    %c0_i32_0 = arith.constant 0 : i32
    %c0_i32_1 = arith.constant 0 : i32
    return %arg0, %c0_i32, %c0_i32_0 : i32, i32, i32
  }
}

</mosaic_0001>

<llo_original>
// kernel: forward.1
$region0: #{forward.1}
  #allocation0 [shape = 'u32[]', space=smem, size = 0x4, offset = 0x4, fixed_abs, tag = 'smem constant byte address 0x4 - core index']
  #allocation1 [shape = 'u32[72,128]{1,0:T(1,128)}', space=vmem, size = 0x9000, scoped, tag = 'internal scratch']
  %s0 = inlined_call_operand.vmem [shape: f32[2,64,36], index: 0, kind: input, shape index: {}]
  %s1 = inlined_call_operand.vmem [shape: f32[2,8,7], index: 1, kind: input, shape index: {}]
  %s2 = inlined_call_operand.vmem [shape: bf16[848,128], index: 2, kind: input, shape index: {}]
  %s3 = inlined_call_operand.vmem [shape: f32[8,128], index: 3, kind: input, shape index: {}]
  %s4 = inlined_call_operand.hbm [shape: f32[2,1,128], index: 4, kind: output, shape index: {}]
  %s5 = sld [smem:[#allocation0]]
  $region49: #{forward.1} parent=0
    _
  %s7 = ssub.s32 1, %s5
  %s8 = scalar_select 0, %s7, %s5
  $region1: #{forward.1} parent=0
    #allocation2 [shape = 'u8[1024]{0}', space=vmem, size = 0x400, scoped, tag = 'output window, operand 0']
    #allocation3 [shape = 's32[2]{0}', space=sflag, size = 0x8, scoped, tag = 'scoped memory for forward.1']
    %9 = vsyncpa [#allocation3], 0
    %s10 = scalar_lea.sflag [#allocation3], 1
    %11 = vsyncpa %s10, 0
    loop: start=0, step=1, limit=4
    $region2: #{forward.1} parent=1 // loop_pre_header
      _
    $region3: #{forward.1} parent=1 // loop_header
      %s13 = sphi 0, %s17
      %p14 = scmp.ge.s32.totalorder %s13, 4
      %s23 = sphi 0, %s25
      %s26 = sphi 0, %s23
      %s27 = sphi 0, %s26
      %s43 = sphi 0, %s27
      %s49 = sphi 0, %s51
      %s52 = sphi 0, %s49
      %s53 = sphi 0, %s52
      %s69 = sphi 0, %s53
      %s73 = sphi 0, %s73
      %s75 = sphi 0, %s73
      %s76 = sphi 0, %s75
      %s90 = sphi 0, %s76
      %s94 = sphi 0, %s94
      %s96 = sphi 0, %s94
      %s97 = sphi 0, %s96
      %s111 = sphi 0, %s97
      %s117 = sphi 0, %s119
      %s120 = sphi 0, %s117
      %s121 = sphi 0, %s120
      %s137 = sphi 0, %s121
    $region4: #{forward.1} parent=1 // loop_header_branch
      %16 = sbr.rel (%p14) target = $region8
    $region5: #{forward.1} parent=1 // loop_body
      %s18 = ssub.s32 %s13, 1
      %s19 = ssub.s32 %s13, 2
      %s20 = sadd.s32 %s13, 1
      %s21 = ssub.s32 %s13, %s20
      %p22 = scmp.eq.s32.totalorder %s21, 0
      %s24 = sadd.s32 %s23, 1
      %s25 = scalar_select %p22, %s23, %s24
      %p28 = pneg %p22
      %p29 = scmp.eq.s32.totalorder %s13, 1
      %p30 = por %p28, %p29
      %p31 = scmp.ne.s32.totalorder %s23, %s26
      %p32 = scmp.eq.s32.totalorder %s13, 0
      %p33 = por %p31, %p32
      %p34 = scmp.ne.s32.totalorder %s23, %s26
      %p35 = scmp.eq.s32.totalorder %s18, 1
      %p36 = por %p34, %p35
      %p37 = scmp.ne.s32.totalorder %s26, %s27
      %p38 = scmp.eq.s32.totalorder %s18, 0
      %p39 = por %p37, %p38
      %p40 = scmp.ne.s32.totalorder %s26, %s27
      %p41 = scmp.eq.s32.totalorder %s19, 1
      %p42 = por %p40, %p41
      %p44 = scmp.ne.s32.totalorder %s27, %s43
      %p45 = scmp.eq.s32.totalorder %s19, 0
      %p46 = por %p44, %p45
      %s47 = ssub.s32 %s13, %s20
      %p48 = scmp.eq.s32.totalorder %s47, 0
      %s50 = sadd.s32 %s49, 1
      %s51 = scalar_select %p48, %s49, %s50
      %p54 = pneg %p48
      %p55 = scmp.eq.s32.totalorder %s13, 1
      %p56 = por %p54, %p55
      %p57 = scmp.ne.s32.totalorder %s49, %s52
      %p58 = scmp.eq.s32.totalorder %s13, 0
      %p59 = por %p57, %p58
      %p60 = scmp.ne.s32.totalorder %s49, %s52
      %p61 = scmp.eq.s32.totalorder %s18, 1
      %p62 = por %p60, %p61
      %p63 = scmp.ne.s32.totalorder %s52, %s53
      %p64 = scmp.eq.s32.totalorder %s18, 0
      %p65 = por %p63, %p64
      %p66 = scmp.ne.s32.totalorder %s52, %s53
      %p67 = scmp.eq.s32.totalorder %s19, 1
      %p68 = por %p66, %p67
      %p70 = scmp.ne.s32.totalorder %s53, %s69
      %p71 = scmp.eq.s32.totalorder %s19, 0
      %p72 = por %p70, %p71
      %s74 = sadd.s32 %s73, 1
      %p77 = scmp.eq.s32.totalorder %s13, 1
      %p78 = scmp.ne.s32.totalorder %s73, %s75
      %p79 = scmp.eq.s32.totalorder %s13, 0
      %p80 = por %p78, %p79
      %p81 = scmp.ne.s32.totalorder %s73, %s75
      %p82 = scmp.eq.s32.totalorder %s18, 1
      %p83 = por %p81, %p82
      %p84 = scmp.ne.s32.totalorder %s75, %s76
      %p85 = scmp.eq.s32.totalorder %s18, 0
      %p86 = por %p84, %p85
      %p87 = scmp.ne.s32.totalorder %s75, %s76
      %p88 = scmp.eq.s32.totalorder %s19, 1
      %p89 = por %p87, %p88
      %p91 = scmp.ne.s32.totalorder %s76, %s90
      %p92 = scmp.eq.s32.totalorder %s19, 0
      %p93 = por %p91, %p92
      %s95 = sadd.s32 %s94, 1
      %p98 = scmp.eq.s32.totalorder %s13, 1
      %p99 = scmp.ne.s32.totalorder %s94, %s96
      %p100 = scmp.eq.s32.totalorder %s13, 0
      %p101 = por %p99, %p100
      %p102 = scmp.ne.s32.totalorder %s94, %s96
      %p103 = scmp.eq.s32.totalorder %s18, 1
      %p104 = por %p102, %p103
      %p105 = scmp.ne.s32.totalorder %s96, %s97
      %p106 = scmp.eq.s32.totalorder %s18, 0
      %p107 = por %p105, %p106
      %p108 = scmp.ne.s32.totalorder %s96, %s97
      %p109 = scmp.eq.s32.totalorder %s19, 1
      %p110 = por %p108, %p109
      %p112 = scmp.ne.s32.totalorder %s97, %s111
      %p113 = scmp.eq.s32.totalorder %s19, 0
      %p114 = por %p112, %p113
      %s115 = ssub.s32 %s13, %s20
      %p116 = scmp.eq.s32.totalorder %s115, 0
      %s118 = sadd.s32 %s117, 1
      %s119 = scalar_select %p116, %s117, %s118
      %p122 = pneg %p116
      %p123 = scmp.eq.s32.totalorder %s13, 1
      %p124 = por %p122, %p123
      %p125 = scmp.ne.s32.totalorder %s117, %s120
      %p126 = scmp.eq.s32.totalorder %s13, 0
      %p127 = por %p125, %p126
      %p128 = scmp.ne.s32.totalorder %s117, %s120
      %p129 = scmp.eq.s32.totalorder %s18, 1
      %p130 = por %p128, %p129
      %p131 = scmp.ne.s32.totalorder %s120, %s121
      %p132 = scmp.eq.s32.totalorder %s18, 0
      %p133 = por %p131, %p132
      %p134 = scmp.ne.s32.totalorder %s120, %s121
      %p135 = scmp.eq.s32.totalorder %s19, 1
      %p136 = por %p134, %p135
      %p138 = scmp.ne.s32.totalorder %s121, %s137
      %p139 = scmp.eq.s32.totalorder %s19, 0
      %p140 = por %p138, %p139
      %p141 = scmp.le.s32.totalorder 1, %s13
      %p142 = scmp.lt.s32.totalorder %s13, 3
      %p143 = pnand %p141, %p142
      %p144 = pneg %p143
      // Predicated region
      $region9: #{forward.1} parent=5 // pred_check
        _
      $region10: #{forward.1} parent=5 // pred_check_branch
        %146 = sbr.rel (%p143) target = $region12
      $region11: #{forward.1} parent=5 // pred_region
        %s147 = ssub.s32 %s13, 1
        // Predicated region
        $region13: #{forward.1} parent=11 // pred_check
          %p148 = pneg %p86
        $region14: #{forward.1} parent=11 // pred_check_branch
          %150 = sbr.rel (%p148) target = $region16
        $region15: #{forward.1} parent=11 // pred_region
          _
        $region16: #{forward.1} parent=11 // pred_fallthru
          _
        // Predicated region
        $region17: #{forward.1} parent=11 // pred_check
          %p151 = pneg %p107
        $region18: #{forward.1} parent=11 // pred_check_branch
          %153 = sbr.rel (%p151) target = $region20
        $region19: #{forward.1} parent=11 // pred_region
          _
        $region20: #{forward.1} parent=11 // pred_fallthru
          _
      $region12: #{forward.1} parent=5 // pred_fallthru
        _
      %p154 = scmp.lt.s32.totalorder %s13, 2
      // Predicated region
      $region21: #{forward.1} parent=5 // pred_check
        %p155 = pneg %p154
      $region22: #{forward.1} parent=5 // pred_check_branch
        %157 = sbr.rel (%p155) target = $region24
      $region23: #{forward.1} parent=5 // pred_region
        // Predicated region
        $region25: #{forward.1} parent=23 // pred_check
          %p158 = pneg %p33
        $region26: #{forward.1} parent=23 // pred_check_branch
          %160 = sbr.rel (%p158) target = $region28
        $region27: #{forward.1} parent=23 // pred_region
          %p161 = scmp.lt.s32.totalorder %s13, 1
          %s162 = scalar_select %p161, %s13, 1
          %s163 = smul.addr %s162, 8
          %s164 = smul.addr %s163, 8
          %s165 = scalar_lea.vmem %s0, %s164
        $region28: #{forward.1} parent=23 // pred_fallthru
          _
        // Predicated region
        $region29: #{forward.1} parent=23 // pred_check
          %p166 = pneg %p59
        $region30: #{forward.1} parent=23 // pred_check_branch
          %168 = sbr.rel (%p166) target = $region32
        $region31: #{forward.1} parent=23 // pred_region
          %p169 = scmp.lt.s32.totalorder %s13, 1
          %s170 = scalar_select %p169, %s13, 1
          %s171 = smul.addr %s170, 8
          %s172 = scalar_lea.vmem %s1, %s171
        $region32: #{forward.1} parent=23 // pred_fallthru
          _
      $region24: #{forward.1} parent=5 // pred_fallthru
        _
      %p173 = scmp.le.s32.totalorder 1, %s13
      %p174 = scmp.lt.s32.totalorder %s13, 3
      %p175 = pnand %p173, %p174
      %p176 = pneg %p175
      // Predicated region
      $region33: #{forward.1} parent=5 // pred_check
        _
      $region34: #{forward.1} parent=5 // pred_check_branch
        %178 = sbr.rel (%p175) target = $region36
      $region35: #{forward.1} parent=5 // pred_region
        %s179 = ssub.s32 %s13, 1
        %p180 = scmp.lt.s32.totalorder %s18, 1
        %s181 = scalar_select %p180, %s18, 1
        %s182 = smul.addr %s181, 8
        %s183 = smul.addr %s182, 8
        %s184 = scalar_lea.vmem %s0, %s183
        %p185 = pneg %p39
        %p186 = pneg %p36
        %p187 = scmp.lt.s32.totalorder %s18, 1
        %s188 = scalar_select %p187, %s18, 1
        %s189 = smul.addr %s188, 8
        %s190 = scalar_lea.vmem %s1, %s189
        %p191 = pneg %p65
        %p192 = pneg %p62
        %p193 = pneg %p86
        %p194 = pneg %p83
        %p195 = pneg %p107
        %p196 = pneg %p104
        %p197 = pneg %p133
        %p198 = pneg %p130
        %s199 = sand.u32 %s120, 1
        %s200 = scalar_lea.sflag [#allocation3], %s199
        %s201 = sand.u32 %s120, 1
        %s202 = scalar_lea.vmem [#allocation2], %s201
        %p203 = scmp.lt.s32.totalorder %s18, 1
        %s204 = scalar_select %p203, %s18, 1
        %s205 = smul.addr %s204, 8
        %s206 = smul.addr %s205, 8
        %s207 = scalar_lea.vmem %s0, %s206
        %p208 = scmp.lt.s32.totalorder %s18, 1
        %s209 = scalar_select %p208, %s18, 1
        %s210 = smul.addr %s209, 8
        %s211 = scalar_lea.vmem %s1, %s210
        %v213 = vld [vmem:[%s207] sm:$0xff]
        %v214 = vld [vmem:[%s207 + $0x8] sm:$0xff]
        %v215 = vld [vmem:[%s207 + $0x10] sm:$0xff]
        %v216 = vld [vmem:[%s207 + $0x18] sm:$0xff]
        %v217 = vld [vmem:[%s207 + $0x20] sm:$0xff]
        %v218 = vld [vmem:[%s207 + $0x28] sm:$0xff]
        %v219 = vld [vmem:[%s207 + $0x30] sm:$0xff]
        %v220 = vld [vmem:[%s207 + $0x38] sm:$0xff]
        %v221 = vpack.c.bf16 %v214, %v213
        %v222 = vpack.c.bf16 %v216, %v215
        %v223 = vpack.c.bf16 %v218, %v217
        %v224 = vpack.c.bf16 %v220, %v219
        %v225 = vld [vmem:[%s2] sm:$0xf]
        %v226 = vld [vmem:[%s2 + $0x4] sm:$0xf]
        %v227 = vld [vmem:[%s2 + $0x8] sm:$0xf]
        %v228 = vld [vmem:[%s2 + $0xc] sm:$0xf]
        %v229 = vld [vmem:[%s2 + $0x10] sm:$0x3]
        %v230 = vld [vmem:[%s3] sm:$0x1]
        %v231 = vperm.slane %v230, 0
        %v237 = vunpack.c.l.b16 %v225
        %v238 = vunpack.c.l.b16 %v226
        %v239 = vunpack.c.l.b16 %v227
        %v240 = vunpack.c.l.b16 %v228
        %v241 = vunpack.c.l.b16 %v229
        %v242 = vpack.c.b16 %v238, %v237
        %v243 = vpack.c.b16 %v240, %v239
        %v244 = vpack.c.b16 %v241, %v241
        %vm247 = vcmask 293888
        %v249 = vsel %vm247, %v221, 0
        %v252 = vsel %vm247, %v222, 0
        %v255 = vsel %vm247, %v223, 0
        %v258 = vsel %vm247, %v224, 0
        %vm260 = vcmask 1041408
        %v262 = vsel %vm260, %v244, 0
        %264 = vmatpush.bf16.msra.mxu0 0
        %265 = vmatpush.bf16.msra.mxu0 0
        %266 = vmatpush.bf16.msra.mxu0 0
        %267 = vmatpush.bf16.msra.mxu0 0
        %268 = vmatpush.bf16.msra.mxu0 0
        %269 = vmatpush.bf16.msra.mxu0 %v262
        %270 = vmatpush.bf16.msra.mxu0 %v243
        %271 = vmatpush.bf16.msra.mxu0 %v242
        %272 = vmatmul.bf16.gmra.mxu0 %v249
        %v273 = vpop.f32.mrf.mxu0
        %v274 = vadd.f32 %v231, %v273
        %v275 = vpop.f32.mrf.mxu0
        %v276 = vadd.f32 %v231, %v275
        %277 = vmatmul.bf16.gmra.mxu0 %v252
        %v278 = vpop.f32.mrf.mxu0
        %v279 = vadd.f32 %v231, %v278
        %v280 = vpop.f32.mrf.mxu0
        %v281 = vadd.f32 %v231, %v280
        %282 = vmatmul.bf16.gmra.mxu0 %v255
        %v283 = vpop.f32.mrf.mxu0
        %v284 = vadd.f32 %v231, %v283
        %v285 = vpop.f32.mrf.mxu0
        %v286 = vadd.f32 %v231, %v285
        %287 = vmatmul.bf16.gmra.mxu0 %v258
        %v288 = vpop.f32.mrf.mxu0
        %v289 = vadd.f32 %v231, %v288
        %v290 = vpop.f32.mrf.mxu0
        %v291 = vadd.f32 %v231, %v290
        %292 = vdwg.mxu0
        %v293 = vmax.f32 %v274, 0.0
        %v294 = vmax.f32 %v276, 0.0
        %v295 = vmax.f32 %v279, 0.0
        %v296 = vmax.f32 %v281, 0.0
        %v297 = vmax.f32 %v284, 0.0
        %v298 = vmax.f32 %v286, 0.0
        %v299 = vmax.f32 %v289, 0.0
        %v300 = vmax.f32 %v291, 0.0
        %v301 = vld [vmem:[%s2 + $0x18] sm:$0xf]
        %v302 = vld [vmem:[%s2 + $0x1c] sm:$0xf]
        %v303 = vld [vmem:[%s2 + $0x20] sm:$0xf]
        %v304 = vld [vmem:[%s2 + $0x24] sm:$0xf]
        %v305 = vld [vmem:[%s2 + $0x28] sm:$0xf]
        %v306 = vld [vmem:[%s2 + $0x2c] sm:$0xf]
        %v307 = vld [vmem:[%s2 + $0x30] sm:$0xf]
        %v308 = vld [vmem:[%s2 + $0x34] sm:$0xf]
        %v309 = vld [vmem:[%s2 + $0x38] sm:$0xf]
        %v310 = vld [vmem:[%s2 + $0x3c] sm:$0xf]
        %v311 = vld [vmem:[%s2 + $0x40] sm:$0xf]
        %v312 = vld [vmem:[%s2 + $0x44] sm:$0xf]
        %v313 = vld [vmem:[%s2 + $0x48] sm:$0xf]
        %v314 = vld [vmem:[%s2 + $0x4c] sm:$0xf]
        %v315 = vld [vmem:[%s2 + $0x50] sm:$0xf]
        %v316 = vld [vmem:[%s2 + $0x54] sm:$0xf]
        %v317 = vld [vmem:[%s2 + $0x58] sm:$0xf]
        %v318 = vld [vmem:[%s2 + $0x5c] sm:$0xf]
        %v319 = vpack.c.bf16 %v294, %v293
        %v320 = vpack.c.bf16 %v296, %v295
        %v321 = vpack.c.bf16 %v298, %v297
        %v322 = vpack.c.bf16 %v300, %v299
        %v341 = vunpack.c.l.b16 %v301
        %v342 = vunpack.c.l.b16 %v302
        %v343 = vunpack.c.l.b16 %v303
        %v344 = vunpack.c.l.b16 %v304
        %v345 = vunpack.c.l.b16 %v305
        %v346 = vunpack.c.l.b16 %v306
        %v347 = vunpack.c.l.b16 %v307
        %v348 = vunpack.c.l.b16 %v308
        %v349 = vunpack.c.l.b16 %v309
        %v350 = vunpack.c.l.b16 %v310
        %v351 = vunpack.c.l.b16 %v311
        %v352 = vunpack.c.l.b16 %v312
        %v353 = vunpack.c.l.b16 %v313
        %v354 = vunpack.c.l.b16 %v314
        %v355 = vunpack.c.l.b16 %v315
        %v356 = vunpack.c.l.b16 %v316
        %v357 = vunpack.c.l.b16 %v317
        %v358 = vunpack.c.l.b16 %v318
        %v359 = vpack.c.b16 %v342, %v341
        %v360 = vpack.c.b16 %v344, %v343
        %v361 = vpack.c.b16 %v346, %v345
        %v362 = vpack.c.b16 %v348, %v347
        %v363 = vpack.c.b16 %v350, %v349
        %v364 = vpack.c.b16 %v352, %v351
        %v365 = vpack.c.b16 %v354, %v353
        %v366 = vpack.c.b16 %v356, %v355
        %v367 = vpack.c.b16 %v358, %v357
        %vm368 = vcmask 523264
        %v370 = vsel %vm368, %v359, 0
        %v373 = vsel %vm368, %v360, 0
        %v376 = vsel %vm368, %v361, 0
        %v379 = vsel %vm368, %v362, 0
        %v382 = vsel %vm368, %v363, 0
        %v385 = vsel %vm368, %v364, 0
        %v388 = vsel %vm368, %v365, 0
        %v391 = vsel %vm368, %v366, 0
        %v394 = vsel %vm368, %v367, 0
        %396 = vmatpush.bf16.msra.mxu0 0
        %397 = vmatpush.bf16.msra.mxu0 0
        %398 = vmatpush.bf16.msra.mxu0 0
        %399 = vmatpush.bf16.msra.mxu0 0
        %400 = vmatpush.bf16.msra.mxu0 %v322
        %401 = vmatpush.bf16.msra.mxu0 %v321
        %402 = vmatpush.bf16.msra.mxu0 %v320
        %403 = vmatpush.bf16.msra.mxu0 %v319
        %404 = vmatmul.bf16.gmra.mxu0 %v370
        %v405 = vpop.f32.mrf.mxu0
        %v406 = vadd.f32 0.0, %v405
        %v407 = vpop.f32.mrf.mxu0
        %v408 = vadd.f32 0.0, %v407
        %409 = vmatmul.bf16.gmra.mxu0 %v373
        %v410 = vpop.f32.mrf.mxu0
        %v411 = vadd.f32 0.0, %v410
        %v412 = vpop.f32.mrf.mxu0
        %v413 = vadd.f32 0.0, %v412
        %414 = vmatmul.bf16.gmra.mxu0 %v376
        %v415 = vpop.f32.mrf.mxu0
        %v416 = vadd.f32 0.0, %v415
        %v417 = vpop.f32.mrf.mxu0
        %v418 = vadd.f32 0.0, %v417
        %419 = vmatmul.bf16.gmra.mxu0 %v379
        %v420 = vpop.f32.mrf.mxu0
        %v421 = vadd.f32 0.0, %v420
        %v422 = vpop.f32.mrf.mxu0
        %v423 = vadd.f32 0.0, %v422
        %424 = vmatmul.bf16.gmra.mxu0 %v382
        %v425 = vpop.f32.mrf.mxu0
        %v426 = vadd.f32 0.0, %v425
        %v427 = vpop.f32.mrf.mxu0
        %v428 = vadd.f32 0.0, %v427
        %429 = vmatmul.bf16.gmra.mxu0 %v385
        %v430 = vpop.f32.mrf.mxu0
        %v431 = vadd.f32 0.0, %v430
        %v432 = vpop.f32.mrf.mxu0
        %v433 = vadd.f32 0.0, %v432
        %434 = vmatmul.bf16.gmra.mxu0 %v388
        %v435 = vpop.f32.mrf.mxu0
        %v436 = vadd.f32 0.0, %v435
        %v437 = vpop.f32.mrf.mxu0
        %v438 = vadd.f32 0.0, %v437
        %439 = vmatmul.bf16.gmra.mxu0 %v391
        %v440 = vpop.f32.mrf.mxu0
        %v441 = vadd.f32 0.0, %v440
        %v442 = vpop.f32.mrf.mxu0
        %v443 = vadd.f32 0.0, %v442
        %444 = vmatmul.bf16.gmra.mxu0 %v394
        %v445 = vpop.f32.mrf.mxu0
        %v446 = vadd.f32 0.0, %v445
        %v447 = vpop.f32.mrf.mxu0
        %v448 = vadd.f32 0.0, %v447
        %449 = vdwg.mxu0
        %v450 = vld [vmem:[%s2 + $0x60] sm:$0xf]
        %v451 = vld [vmem:[%s2 + $0x64] sm:$0xf]
        %v452 = vld [vmem:[%s2 + $0x68] sm:$0xf]
        %v453 = vld [vmem:[%s2 + $0x6c] sm:$0xf]
        %v454 = vld [vmem:[%s2 + $0x70] sm:$0xf]
        %v455 = vld [vmem:[%s2 + $0x74] sm:$0xf]
        %v456 = vld [vmem:[%s2 + $0x78] sm:$0xf]
        %v457 = vld [vmem:[%s2 + $0x7c] sm:$0xf]
        %v458 = vld [vmem:[%s2 + $0x80] sm:$0xf]
        %v459 = vld [vmem:[%s2 + $0x84] sm:$0xf]
        %v460 = vld [vmem:[%s2 + $0x88] sm:$0xf]
        %v461 = vld [vmem:[%s2 + $0x8c] sm:$0xf]
        %v462 = vld [vmem:[%s2 + $0x90] sm:$0xf]
        %v463 = vld [vmem:[%s2 + $0x94] sm:$0xf]
        %v464 = vld [vmem:[%s2 + $0x98] sm:$0xf]
        %v465 = vld [vmem:[%s2 + $0x9c] sm:$0xf]
        %v466 = vld [vmem:[%s2 + $0xa0] sm:$0xf]
        %v467 = vld [vmem:[%s2 + $0xa4] sm:$0xf]
        %v468 = vpack.c.bf16 %v408, %v406
        %v469 = vpack.c.bf16 %v413, %v411
        %v472 = vunpack.c.l.b16 %v452
        %v473 = vunpack.c.l.b16 %v453
        %v474 = vpack.c.b16 %v473, %v472
        %vm476 = vcmask 130048
        %v478 = vsel %vm476, %v469, 0
        %480 = vmatpush.bf16.msra.mxu0 0
        %481 = vmatpush.bf16.msra.mxu0 0
        %482 = vmatpush.bf16.msra.mxu0 0
        %483 = vmatpush.bf16.msra.mxu0 0
        %484 = vmatpush.bf16.msra.mxu0 0
        %485 = vmatpush.bf16.msra.mxu0 0
        %486 = vmatpush.bf16.msra.mxu0 0
        %487 = vmatpush.bf16.msra.mxu0 %v474
        %488 = vmatmul.bf16.gmra.mxu0 %v478
        %v489 = vpop.f32.mrf.mxu0
        %v490 = vadd.f32 0.0, %v489
        %v491 = vpop.f32.mrf.mxu0
        %v492 = vadd.f32 0.0, %v491
        %493 = vdwg.mxu0
        %v496 = vunpack.c.l.b16 %v450
        %v497 = vunpack.c.l.b16 %v451
        %v498 = vpack.c.b16 %v497, %v496
        %v501 = vsel %vm476, %v468, 0
        %503 = vmatpush.bf16.msra.mxu0 0
        %504 = vmatpush.bf16.msra.mxu0 0
        %505 = vmatpush.bf16.msra.mxu0 0
        %506 = vmatpush.bf16.msra.mxu0 0
        %507 = vmatpush.bf16.msra.mxu0 0
        %508 = vmatpush.bf16.msra.mxu0 0
        %509 = vmatpush.bf16.msra.mxu0 0
        %510 = vmatpush.bf16.msra.mxu0 %v498
        %511 = vmatmul.bf16.gmra.mxu0 %v501
        %v512 = vpop.f32.mrf.mxu0
        %v513 = vadd.f32 %v490, %v512
        %v514 = vpop.f32.mrf.mxu0
        %v515 = vadd.f32 %v492, %v514
        %516 = vdwg.mxu0
        %v517 = vpack.c.bf16 %v418, %v416
        %v520 = vunpack.c.l.b16 %v454
        %v521 = vunpack.c.l.b16 %v455
        %v522 = vpack.c.b16 %v521, %v520
        %v525 = vsel %vm476, %v517, 0
        %527 = vmatpush.bf16.msra.mxu0 0
        %528 = vmatpush.bf16.msra.mxu0 0
        %529 = vmatpush.bf16.msra.mxu0 0
        %530 = vmatpush.bf16.msra.mxu0 0
        %531 = vmatpush.bf16.msra.mxu0 0
        %532 = vmatpush.bf16.msra.mxu0 0
        %533 = vmatpush.bf16.msra.mxu0 0
        %534 = vmatpush.bf16.msra.mxu0 %v522
        %535 = vmatmul.bf16.gmra.mxu0 %v525
        %v536 = vpop.f32.mrf.mxu0
        %v537 = vadd.f32 0.0, %v536
        %v538 = vpop.f32.mrf.mxu0
        %v539 = vadd.f32 0.0, %v538
        %540 = vdwg.mxu0
        %v541 = vadd.f32 %v513, %v537
        %v542 = vadd.f32 %v515, %v539
        %v543 = vpack.c.bf16 %v423, %v421
        %v546 = vunpack.c.l.b16 %v456
        %v547 = vunpack.c.l.b16 %v457
        %v548 = vpack.c.b16 %v547, %v546
        %v551 = vsel %vm476, %v543, 0
        %553 = vmatpush.bf16.msra.mxu0 0
        %554 = vmatpush.bf16.msra.mxu0 0
        %555 = vmatpush.bf16.msra.mxu0 0
        %556 = vmatpush.bf16.msra.mxu0 0
        %557 = vmatpush.bf16.msra.mxu0 0
        %558 = vmatpush.bf16.msra.mxu0 0
        %559 = vmatpush.bf16.msra.mxu0 0
        %560 = vmatpush.bf16.msra.mxu0 %v548
        %561 = vmatmul.bf16.gmra.mxu0 %v551
        %v562 = vpop.f32.mrf.mxu0
        %v563 = vadd.f32 0.0, %v562
        %v564 = vpop.f32.mrf.mxu0
        %v565 = vadd.f32 0.0, %v564
        %566 = vdwg.mxu0
        %v567 = vadd.f32 %v541, %v563
        %v568 = vadd.f32 %v542, %v565
        %v569 = vpack.c.bf16 %v428, %v426
        %v572 = vunpack.c.l.b16 %v458
        %v573 = vunpack.c.l.b16 %v459
        %v574 = vpack.c.b16 %v573, %v572
        %v577 = vsel %vm476, %v569, 0
        %579 = vmatpush.bf16.msra.mxu0 0
        %580 = vmatpush.bf16.msra.mxu0 0
        %581 = vmatpush.bf16.msra.mxu0 0
        %582 = vmatpush.bf16.msra.mxu0 0
        %583 = vmatpush.bf16.msra.mxu0 0
        %584 = vmatpush.bf16.msra.mxu0 0
        %585 = vmatpush.bf16.msra.mxu0 0
        %586 = vmatpush.bf16.msra.mxu0 %v574
        %587 = vmatmul.bf16.gmra.mxu0 %v577
        %v588 = vpop.f32.mrf.mxu0
        %v589 = vadd.f32 0.0, %v588
        %v590 = vpop.f32.mrf.mxu0
        %v591 = vadd.f32 0.0, %v590
        %592 = vdwg.mxu0
        %v593 = vadd.f32 %v567, %v589
        %v594 = vadd.f32 %v568, %v591
        %v595 = vpack.c.bf16 %v433, %v431
        %v598 = vunpack.c.l.b16 %v460
        %v599 = vunpack.c.l.b16 %v461
        %v600 = vpack.c.b16 %v599, %v598
        %v603 = vsel %vm476, %v595, 0
        %605 = vmatpush.bf16.msra.mxu0 0
        %606 = vmatpush.bf16.msra.mxu0 0
        %607 = vmatpush.bf16.msra.mxu0 0
        %608 = vmatpush.bf16.msra.mxu0 0
        %609 = vmatpush.bf16.msra.mxu0 0
        %610 = vmatpush.bf16.msra.mxu0 0
        %611 = vmatpush.bf16.msra.mxu0 0
        %612 = vmatpush.bf16.msra.mxu0 %v600
        %613 = vmatmul.bf16.gmra.mxu0 %v603
        %v614 = vpop.f32.mrf.mxu0
        %v615 = vadd.f32 0.0, %v614
        %v616 = vpop.f32.mrf.mxu0
        %v617 = vadd.f32 0.0, %v616
        %618 = vdwg.mxu0
        %v619 = vadd.f32 %v593, %v615
        %v620 = vadd.f32 %v594, %v617
        %v621 = vpack.c.bf16 %v438, %v436
        %v624 = vunpack.c.l.b16 %v462
        %v625 = vunpack.c.l.b16 %v463
        %v626 = vpack.c.b16 %v625, %v624
        %v629 = vsel %vm476, %v621, 0
        %631 = vmatpush.bf16.msra.mxu0 0
        %632 = vmatpush.bf16.msra.mxu0 0
        %633 = vmatpush.bf16.msra.mxu0 0
        %634 = vmatpush.bf16.msra.mxu0 0
        %635 = vmatpush.bf16.msra.mxu0 0
        %636 = vmatpush.bf16.msra.mxu0 0
        %637 = vmatpush.bf16.msra.mxu0 0
        %638 = vmatpush.bf16.msra.mxu0 %v626
        %639 = vmatmul.bf16.gmra.mxu0 %v629
        %v640 = vpop.f32.mrf.mxu0
        %v641 = vadd.f32 0.0, %v640
        %v642 = vpop.f32.mrf.mxu0
        %v643 = vadd.f32 0.0, %v642
        %644 = vdwg.mxu0
        %v645 = vadd.f32 %v619, %v641
        %v646 = vadd.f32 %v620, %v643
        %v647 = vpack.c.bf16 %v443, %v441
        %v650 = vunpack.c.l.b16 %v464
        %v651 = vunpack.c.l.b16 %v465
        %v652 = vpack.c.b16 %v651, %v650
        %v655 = vsel %vm476, %v647, 0
        %657 = vmatpush.bf16.msra.mxu0 0
        %658 = vmatpush.bf16.msra.mxu0 0
        %659 = vmatpush.bf16.msra.mxu0 0
        %660 = vmatpush.bf16.msra.mxu0 0
        %661 = vmatpush.bf16.msra.mxu0 0
        %662 = vmatpush.bf16.msra.mxu0 0
        %663 = vmatpush.bf16.msra.mxu0 0
        %664 = vmatpush.bf16.msra.mxu0 %v652
        %665 = vmatmul.bf16.gmra.mxu0 %v655
        %v666 = vpop.f32.mrf.mxu0
        %v667 = vadd.f32 0.0, %v666
        %v668 = vpop.f32.mrf.mxu0
        %v669 = vadd.f32 0.0, %v668
        %670 = vdwg.mxu0
        %v671 = vadd.f32 %v645, %v667
        %v672 = vadd.f32 %v646, %v669
        %v673 = vpack.c.bf16 %v448, %v446
        %v676 = vunpack.c.l.b16 %v466
        %v677 = vunpack.c.l.b16 %v467
        %v678 = vpack.c.b16 %v677, %v676
        %v681 = vsel %vm476, %v673, 0
        %683 = vmatpush.bf16.msra.mxu0 0
        %684 = vmatpush.bf16.msra.mxu0 0
        %685 = vmatpush.bf16.msra.mxu0 0
        %686 = vmatpush.bf16.msra.mxu0 0
        %687 = vmatpush.bf16.msra.mxu0 0
        %688 = vmatpush.bf16.msra.mxu0 0
        %689 = vmatpush.bf16.msra.mxu0 0
        %690 = vmatpush.bf16.msra.mxu0 %v678
        %691 = vmatmul.bf16.gmra.mxu0 %v681
        %v692 = vpop.f32.mrf.mxu0
        %v693 = vadd.f32 0.0, %v692
        %v694 = vpop.f32.mrf.mxu0
        %v695 = vadd.f32 0.0, %v694
        %696 = vdwg.mxu0
        %v697 = vadd.f32 %v671, %v693
        %v698 = vadd.f32 %v672, %v695
        %v699 = vld [vmem:[%s3 + $0x2] sm:$0x1]
        %v700 = vperm.slane %v699, 0
        %v701 = vadd.f32 %v697, %v700
        %v702 = vadd.f32 %v698, %v700
        %v703 = vmax.f32 %v701, 0.0
        %v704 = vmax.f32 %v702, 0.0
        %v705 = vld [vmem:[%s2 + $0xc8] sm:$0x3]
        %v706 = vpack.c.bf16 %v704, %v703
        %v708 = vsel %vm476, %v705, 0
        %710 = vmatpush.bf16.msra.mxu0 0
        %711 = vmatpush.bf16.msra.mxu0 0
        %712 = vmatpush.bf16.msra.mxu0 0
        %713 = vmatpush.bf16.msra.mxu0 0
        %714 = vmatpush.bf16.msra.mxu0 0
        %715 = vmatpush.bf16.msra.mxu0 0
        %716 = vmatpush.bf16.msra.mxu0 0
        %717 = vmatpush.bf16.msra.mxu0 %v706
        %718 = vmatmul.bf16.gmra.mxu0 %v708
        %v719 = vpop.f32.mrf.mxu0
        %v720 = vadd.f32 0.0, %v719
        %v721 = vpop.f32.mrf.mxu0
        %722 = vdwg.mxu0
        %v723 = vld [vmem:[%s2 + $0xa8] sm:$0xf]
        %v724 = vld [vmem:[%s2 + $0xac] sm:$0xf]
        %v725 = vld [vmem:[%s2 + $0xb0] sm:$0xf]
        %v726 = vld [vmem:[%s2 + $0xb4] sm:$0xf]
        %v727 = vld [vmem:[%s2 + $0xb8] sm:$0xf]
        %v728 = vld [vmem:[%s2 + $0xbc] sm:$0xf]
        %v729 = vld [vmem:[%s2 + $0xc0] sm:$0xf]
        %v730 = vld [vmem:[%s2 + $0xc4] sm:$0xf]
        %v731 = vld [vmem:[%s3 + $0x4] sm:$0x1]
        %v732 = vpack.c.bf16 %v720, %v720
        %v735 = vunpack.c.l.b16 %v723
        %v736 = vunpack.c.l.b16 %v724
        %v737 = vpack.c.b16 %v736, %v735
        %v740 = vsel %vm476, %v732, 0
        %742 = vmatpush.bf16.msra.mxu0 0
        %743 = vmatpush.bf16.msra.mxu0 0
        %744 = vmatpush.bf16.msra.mxu0 0
        %745 = vmatpush.bf16.msra.mxu0 0
        %746 = vmatpush.bf16.msra.mxu0 0
        %747 = vmatpush.bf16.msra.mxu0 0
        %748 = vmatpush.bf16.msra.mxu0 0
        %749 = vmatpush.bf16.msra.mxu0 %v737
        %750 = vmatmul.bf16.gmra.mxu0 %v740
        %v751 = vpop.f32.mrf.mxu0
        %v752 = vadd.f32 0.0, %v751
        %v753 = vpop.f32.mrf.mxu0
        %754 = vdwg.mxu0
        %v755 = vadd.f32 %v731, %v752
        %v756 = vshrl.u32 %v732, 16
        %v760 = vunpack.c.l.b16 %v725
        %v761 = vunpack.c.l.b16 %v726
        %v762 = vpack.c.b16 %v761, %v760
        %v765 = vsel %vm476, %v756, 0
        %767 = vmatpush.bf16.msra.mxu0 0
        %768 = vmatpush.bf16.msra.mxu0 0
        %769 = vmatpush.bf16.msra.mxu0 0
        %770 = vmatpush.bf16.msra.mxu0 0
        %771 = vmatpush.bf16.msra.mxu0 0
        %772 = vmatpush.bf16.msra.mxu0 0
        %773 = vmatpush.bf16.msra.mxu0 0
        %774 = vmatpush.bf16.msra.mxu0 %v762
        %775 = vmatmul.bf16.gmra.mxu0 %v765
        %v776 = vpop.f32.mrf.mxu0
        %v777 = vadd.f32 0.0, %v776
        %v778 = vpop.f32.mrf.mxu0
        %779 = vdwg.mxu0
        %v780 = vadd.f32 %v755, %v777
        %v782 = vrot.slane %v732, 1
        %v785 = vunpack.c.l.b16 %v727
        %v786 = vunpack.c.l.b16 %v728
        %v787 = vpack.c.b16 %v786, %v785
        %v790 = vsel %vm476, %v782, 0
        %792 = vmatpush.bf16.msra.mxu0 0
        %793 = vmatpush.bf16.msra.mxu0 0
        %794 = vmatpush.bf16.msra.mxu0 0
        %795 = vmatpush.bf16.msra.mxu0 0
        %796 = vmatpush.bf16.msra.mxu0 0
        %797 = vmatpush.bf16.msra.mxu0 0
        %798 = vmatpush.bf16.msra.mxu0 0
        %799 = vmatpush.bf16.msra.mxu0 %v787
        %800 = vmatmul.bf16.gmra.mxu0 %v790
        %v801 = vpop.f32.mrf.mxu0
        %v802 = vadd.f32 0.0, %v801
        %v803 = vpop.f32.mrf.mxu0
        %804 = vdwg.mxu0
        %v805 = vadd.f32 %v780, %v802
        %v806 = vrot.slane %v756, 1
        %v809 = vunpack.c.l.b16 %v729
        %v810 = vunpack.c.l.b16 %v730
        %v811 = vpack.c.b16 %v810, %v809
        %v814 = vsel %vm476, %v806, 0
        %816 = vmatpush.bf16.msra.mxu0 0
        %817 = vmatpush.bf16.msra.mxu0 0
        %818 = vmatpush.bf16.msra.mxu0 0
        %819 = vmatpush.bf16.msra.mxu0 0
        %820 = vmatpush.bf16.msra.mxu0 0
        %821 = vmatpush.bf16.msra.mxu0 0
        %822 = vmatpush.bf16.msra.mxu0 0
        %823 = vmatpush.bf16.msra.mxu0 %v811
        %824 = vmatmul.bf16.gmra.mxu0 %v814
        %v825 = vpop.f32.mrf.mxu0
        %v826 = vadd.f32 0.0, %v825
        %v827 = vpop.f32.mrf.mxu0
        %828 = vdwg.mxu0
        %v829 = vadd.f32 %v805, %v826
        %v830 = vld [vmem:[%s211] sm:$0xff]
        %v831 = vpack.c.bf16 %v830, %v830
        %v832 = vld [vmem:[%s2 + $0xd0] sm:$0xf]
        %v833 = vld [vmem:[%s3 + $0x1] sm:$0x1]
        %v834 = vperm.slane %v833, 0
        %vm835 = vcmask 56320
        %v837 = vsel %vm835, %v831, 0
        %vm839 = vcmask 1042432
        %vm840 = vcmask 1043456
        %v841 = vsel %vm839, 4294967295, 65535
        %v842 = vsel %vm840, %v841, 0
        %v844 = vand.u32 %v832, %v842
        %846 = vmatpush.bf16.msra.mxu0 0
        %847 = vmatpush.bf16.msra.mxu0 0
        %848 = vmatpush.bf16.msra.mxu0 0
        %849 = vmatpush.bf16.msra.mxu0 0
        %850 = vmatpush.bf16.msra.mxu0 0
        %851 = vmatpush.bf16.msra.mxu0 0
        %852 = vmatpush.bf16.msra.mxu0 0
        %853 = vmatpush.bf16.msra.mxu0 %v844
        %854 = vmatmul.bf16.gmra.mxu0 %v837
        %v855 = vpop.f32.mrf.mxu0
        %v856 = vadd.f32 %v834, %v855
        %v857 = vpop.f32.mrf.mxu0
        %858 = vdwg.mxu0
        %v859 = vmax.f32 %v856, 0.0
        %v860 = vld [vmem:[%s2 + $0xd8] sm:$0xf]
        %v861 = vld [vmem:[%s2 + $0xdc] sm:$0xf]
        %v862 = vld [vmem:[%s2 + $0xe0] sm:$0xf]
        %v863 = vld [vmem:[%s2 + $0xe4] sm:$0xf]
        %v864 = vld [vmem:[%s2 + $0xe8] sm:$0xf]
        %v865 = vld [vmem:[%s2 + $0xec] sm:$0xf]
        %v866 = vld [vmem:[%s2 + $0xf0] sm:$0xf]
        %v867 = vpack.c.bf16 %v859, %v859
        %v875 = vunpack.c.l.b16 %v860
        %v876 = vunpack.c.l.b16 %v861
        %v877 = vunpack.c.l.b16 %v862
        %v878 = vunpack.c.l.b16 %v863
        %v879 = vunpack.c.l.b16 %v864
        %v880 = vunpack.c.l.b16 %v865
        %v881 = vunpack.c.l.b16 %v866
        %v882 = vpack.c.b16 %v876, %v875
        %v883 = vpack.c.b16 %v878, %v877
        %v884 = vpack.c.b16 %v880, %v879
        %v885 = vpack.c.b16 %v881, %v881
        %vm886 = vcmask 64512
        %v888 = vsel %vm886, %v882, 0
        %v891 = vsel %vm886, %v883, 0
        %v894 = vsel %vm886, %v884, 0
        %v897 = vsel %vm886, %v885, 0
        %v900 = vsel %vm840, %v867, 0
        %902 = vmatpush.bf16.msra.mxu0 0
        %903 = vmatpush.bf16.msra.mxu0 0
        %904 = vmatpush.bf16.msra.mxu0 0
        %905 = vmatpush.bf16.msra.mxu0 0
        %906 = vmatpush.bf16.msra.mxu0 0
        %907 = vmatpush.bf16.msra.mxu0 0
        %908 = vmatpush.bf16.msra.mxu0 0
        %909 = vmatpush.bf16.msra.mxu0 %v900
        %910 = vmatmul.bf16.gmra.mxu0 %v888
        %v911 = vpop.f32.mrf.mxu0
        %v912 = vadd.f32 0.0, %v911
        %v913 = vpop.f32.mrf.mxu0
        %v914 = vadd.f32 0.0, %v913
        %915 = vmatmul.bf16.gmra.mxu0 %v891
        %v916 = vpop.f32.mrf.mxu0
        %v917 = vadd.f32 0.0, %v916
        %v918 = vpop.f32.mrf.mxu0
        %v919 = vadd.f32 0.0, %v918
        %920 = vmatmul.bf16.gmra.mxu0 %v894
        %v921 = vpop.f32.mrf.mxu0
        %v922 = vadd.f32 0.0, %v921
        %v923 = vpop.f32.mrf.mxu0
        %v924 = vadd.f32 0.0, %v923
        %925 = vmatmul.bf16.gmra.mxu0 %v897
        %v926 = vpop.f32.mrf.mxu0
        %v927 = vadd.f32 0.0, %v926
        %v928 = vpop.f32.mrf.mxu0
        %929 = vdwg.mxu0
        %v930 = vld [vmem:[%s2 + $0xf8] sm:$0xf]
        %v931 = vld [vmem:[%s2 + $0xfc] sm:$0xf]
        %v932 = vld [vmem:[%s2 + $0x100] sm:$0xf]
        %v933 = vld [vmem:[%s2 + $0x104] sm:$0xf]
        %v934 = vld [vmem:[%s2 + $0x108] sm:$0xf]
        %v935 = vld [vmem:[%s2 + $0x10c] sm:$0xf]
        %v936 = vld [vmem:[%s2 + $0x110] sm:$0xf]
        %v937 = vld [vmem:[%s2 + $0x114] sm:$0xf]
        %v938 = vld [vmem:[%s2 + $0x118] sm:$0xf]
        %v939 = vld [vmem:[%s2 + $0x11c] sm:$0xf]
        %v940 = vld [vmem:[%s2 + $0x120] sm:$0xf]
        %v941 = vld [vmem:[%s2 + $0x124] sm:$0xf]
        %v942 = vld [vmem:[%s2 + $0x128] sm:$0xf]
        %v943 = vld [vmem:[%s2 + $0x12c] sm:$0xf]
        %v944 = vpack.c.bf16 %v912, %v912
        %v945 = vpack.c.bf16 %v914, %v914
        %v948 = vunpack.c.l.b16 %v932
        %v949 = vunpack.c.l.b16 %v933
        %v950 = vpack.c.b16 %v949, %v948
        %v953 = vsel %vm476, %v945, 0
        %955 = vmatpush.bf16.msra.mxu0 0
        %956 = vmatpush.bf16.msra.mxu0 0
        %957 = vmatpush.bf16.msra.mxu0 0
        %958 = vmatpush.bf16.msra.mxu0 0
        %959 = vmatpush.bf16.msra.mxu0 0
        %960 = vmatpush.bf16.msra.mxu0 0
        %961 = vmatpush.bf16.msra.mxu0 0
        %962 = vmatpush.bf16.msra.mxu0 %v950
        %963 = vmatmul.bf16.gmra.mxu0 %v953
        %v964 = vpop.f32.mrf.mxu0
        %v965 = vadd.f32 0.0, %v964
        %v966 = vpop.f32.mrf.mxu0
        %967 = vdwg.mxu0
        %v970 = vunpack.c.l.b16 %v930
        %v971 = vunpack.c.l.b16 %v931
        %v972 = vpack.c.b16 %v971, %v970
        %v975 = vsel %vm476, %v944, 0
        %977 = vmatpush.bf16.msra.mxu0 0
        %978 = vmatpush.bf16.msra.mxu0 0
        %979 = vmatpush.bf16.msra.mxu0 0
        %980 = vmatpush.bf16.msra.mxu0 0
        %981 = vmatpush.bf16.msra.mxu0 0
        %982 = vmatpush.bf16.msra.mxu0 0
        %983 = vmatpush.bf16.msra.mxu0 0
        %984 = vmatpush.bf16.msra.mxu0 %v972
        %985 = vmatmul.bf16.gmra.mxu0 %v975
        %v986 = vpop.f32.mrf.mxu0
        %v987 = vadd.f32 %v965, %v986
        %v988 = vpop.f32.mrf.mxu0
        %989 = vdwg.mxu0
        %v990 = vpack.c.bf16 %v917, %v917
        %v993 = vunpack.c.l.b16 %v934
        %v994 = vunpack.c.l.b16 %v935
        %v995 = vpack.c.b16 %v994, %v993
        %v998 = vsel %vm476, %v990, 0
        %1000 = vmatpush.bf16.msra.mxu0 0
        %1001 = vmatpush.bf16.msra.mxu0 0
        %1002 = vmatpush.bf16.msra.mxu0 0
        %1003 = vmatpush.bf16.msra.mxu0 0
        %1004 = vmatpush.bf16.msra.mxu0 0
        %1005 = vmatpush.bf16.msra.mxu0 0
        %1006 = vmatpush.bf16.msra.mxu0 0
        %1007 = vmatpush.bf16.msra.mxu0 %v995
        %1008 = vmatmul.bf16.gmra.mxu0 %v998
        %v1009 = vpop.f32.mrf.mxu0
        %v1010 = vadd.f32 0.0, %v1009
        %v1011 = vpop.f32.mrf.mxu0
        %1012 = vdwg.mxu0
        %v1013 = vadd.f32 %v987, %v1010
        %v1014 = vpack.c.bf16 %v919, %v919
        %v1017 = vunpack.c.l.b16 %v936
        %v1018 = vunpack.c.l.b16 %v937
        %v1019 = vpack.c.b16 %v1018, %v1017
        %v1022 = vsel %vm476, %v1014, 0
        %1024 = vmatpush.bf16.msra.mxu0 0
        %1025 = vmatpush.bf16.msra.mxu0 0
        %1026 = vmatpush.bf16.msra.mxu0 0
        %1027 = vmatpush.bf16.msra.mxu0 0
        %1028 = vmatpush.bf16.msra.mxu0 0
        %1029 = vmatpush.bf16.msra.mxu0 0
        %1030 = vmatpush.bf16.msra.mxu0 0
        %1031 = vmatpush.bf16.msra.mxu0 %v1019
        %1032 = vmatmul.bf16.gmra.mxu0 %v1022
        %v1033 = vpop.f32.mrf.mxu0
        %v1034 = vadd.f32 0.0, %v1033
        %v1035 = vpop.f32.mrf.mxu0
        %1036 = vdwg.mxu0
        %v1037 = vadd.f32 %v1013, %v1034
        %v1038 = vpack.c.bf16 %v922, %v922
        %v1041 = vunpack.c.l.b16 %v938
        %v1042 = vunpack.c.l.b16 %v939
        %v1043 = vpack.c.b16 %v1042, %v1041
        %v1046 = vsel %vm476, %v1038, 0
        %1048 = vmatpush.bf16.msra.mxu0 0
        %1049 = vmatpush.bf16.msra.mxu0 0
        %1050 = vmatpush.bf16.msra.mxu0 0
        %1051 = vmatpush.bf16.msra.mxu0 0
        %1052 = vmatpush.bf16.msra.mxu0 0
        %1053 = vmatpush.bf16.msra.mxu0 0
        %1054 = vmatpush.bf16.msra.mxu0 0
        %1055 = vmatpush.bf16.msra.mxu0 %v1043
        %1056 = vmatmul.bf16.gmra.mxu0 %v1046
        %v1057 = vpop.f32.mrf.mxu0
        %v1058 = vadd.f32 0.0, %v1057
        %v1059 = vpop.f32.mrf.mxu0
        %1060 = vdwg.mxu0
        %v1061 = vadd.f32 %v1037, %v1058
        %v1062 = vpack.c.bf16 %v924, %v924
        %v1065 = vunpack.c.l.b16 %v940
        %v1066 = vunpack.c.l.b16 %v941
        %v1067 = vpack.c.b16 %v1066, %v1065
        %v1070 = vsel %vm476, %v1062, 0
        %1072 = vmatpush.bf16.msra.mxu0 0
        %1073 = vmatpush.bf16.msra.mxu0 0
        %1074 = vmatpush.bf16.msra.mxu0 0
        %1075 = vmatpush.bf16.msra.mxu0 0
        %1076 = vmatpush.bf16.msra.mxu0 0
        %1077 = vmatpush.bf16.msra.mxu0 0
        %1078 = vmatpush.bf16.msra.mxu0 0
        %1079 = vmatpush.bf16.msra.mxu0 %v1067
        %1080 = vmatmul.bf16.gmra.mxu0 %v1070
        %v1081 = vpop.f32.mrf.mxu0
        %v1082 = vadd.f32 0.0, %v1081
        %v1083 = vpop.f32.mrf.mxu0
        %1084 = vdwg.mxu0
        %v1085 = vadd.f32 %v1061, %v1082
        %v1086 = vpack.c.bf16 %v927, %v927
        %v1089 = vunpack.c.l.b16 %v942
        %v1090 = vunpack.c.l.b16 %v943
        %v1091 = vpack.c.b16 %v1090, %v1089
        %v1094 = vsel %vm476, %v1086, 0
        %1096 = vmatpush.bf16.msra.mxu0 0
        %1097 = vmatpush.bf16.msra.mxu0 0
        %1098 = vmatpush.bf16.msra.mxu0 0
        %1099 = vmatpush.bf16.msra.mxu0 0
        %1100 = vmatpush.bf16.msra.mxu0 0
        %1101 = vmatpush.bf16.msra.mxu0 0
        %1102 = vmatpush.bf16.msra.mxu0 0
        %1103 = vmatpush.bf16.msra.mxu0 %v1091
        %1104 = vmatmul.bf16.gmra.mxu0 %v1094
        %v1105 = vpop.f32.mrf.mxu0
        %v1106 = vadd.f32 0.0, %v1105
        %v1107 = vpop.f32.mrf.mxu0
        %1108 = vdwg.mxu0
        %v1109 = vadd.f32 %v1085, %v1106
        %v1110 = vld [vmem:[%s3 + $0x3] sm:$0x1]
        %v1111 = vperm.slane %v1110, 0
        %v1112 = vadd.f32 %v1109, %v1111
        %v1113 = vmax.f32 %v1112, 0.0
        %v1114 = vld [vmem:[%s2 + $0x140] sm:$0x1]
        %v1115 = vpack.c.bf16 %v1113, %v1113
        %v1117 = vsel %vm886, %v1114, 0
        %v1120 = vsel %vm840, %v1115, 0
        %1122 = vmatpush.bf16.msra.mxu0 0
        %1123 = vmatpush.bf16.msra.mxu0 0
        %1124 = vmatpush.bf16.msra.mxu0 0
        %1125 = vmatpush.bf16.msra.mxu0 0
        %1126 = vmatpush.bf16.msra.mxu0 0
        %1127 = vmatpush.bf16.msra.mxu0 0
        %1128 = vmatpush.bf16.msra.mxu0 0
        %1129 = vmatpush.bf16.msra.mxu0 %v1120
        %1130 = vmatmul.bf16.gmra.mxu0 %v1117
        %v1131 = vpop.f32.mrf.mxu0
        %v1132 = vadd.f32 0.0, %v1131
        %v1133 = vpop.f32.mrf.mxu0
        %1134 = vdwg.mxu0
        %v1135 = vld [vmem:[%s2 + $0x130] sm:$0xf]
        %v1136 = vld [vmem:[%s2 + $0x134] sm:$0xf]
        %v1137 = vld [vmem:[%s2 + $0x138] sm:$0xf]
        %v1138 = vld [vmem:[%s2 + $0x13c] sm:$0xf]
        %v1139 = vld [vmem:[%s3 + $0x5] sm:$0x1]
        %v1140 = vpack.c.bf16 %v1132, %v1132
        %v1143 = vunpack.c.l.b16 %v1135
        %v1144 = vunpack.c.l.b16 %v1136
        %v1145 = vpack.c.b16 %v1144, %v1143
        %v1148 = vsel %vm476, %v1140, 0
        %1150 = vmatpush.bf16.msra.mxu0 0
        %1151 = vmatpush.bf16.msra.mxu0 0
        %1152 = vmatpush.bf16.msra.mxu0 0
        %1153 = vmatpush.bf16.msra.mxu0 0
        %1154 = vmatpush.bf16.msra.mxu0 0
        %1155 = vmatpush.bf16.msra.mxu0 0
        %1156 = vmatpush.bf16.msra.mxu0 0
        %1157 = vmatpush.bf16.msra.mxu0 %v1145
        %1158 = vmatmul.bf16.gmra.mxu0 %v1148
        %v1159 = vpop.f32.mrf.mxu0
        %v1160 = vadd.f32 0.0, %v1159
        %v1161 = vpop.f32.mrf.mxu0
        %1162 = vdwg.mxu0
        %v1163 = vadd.f32 %v1139, %v1160
        %v1164 = vshrl.u32 %v1140, 16
        %v1168 = vunpack.c.l.b16 %v1137
        %v1169 = vunpack.c.l.b16 %v1138
        %v1170 = vpack.c.b16 %v1169, %v1168
        %v1173 = vsel %vm476, %v1164, 0
        %1175 = vmatpush.bf16.msra.mxu0 0
        %1176 = vmatpush.bf16.msra.mxu0 0
        %1177 = vmatpush.bf16.msra.mxu0 0
        %1178 = vmatpush.bf16.msra.mxu0 0
        %1179 = vmatpush.bf16.msra.mxu0 0
        %1180 = vmatpush.bf16.msra.mxu0 0
        %1181 = vmatpush.bf16.msra.mxu0 0
        %1182 = vmatpush.bf16.msra.mxu0 %v1170
        %1183 = vmatmul.bf16.gmra.mxu0 %v1173
        %v1184 = vpop.f32.mrf.mxu0
        %v1185 = vadd.f32 0.0, %v1184
        %v1186 = vpop.f32.mrf.mxu0
        %1187 = vdwg.mxu0
        %v1188 = vadd.f32 %v1163, %v1185
        %v1189 = vpack.c.bf16 %v829, %v829
        %v1190 = vld [vmem:[%s2 + $0x148] sm:$0xf]
        %v1191 = vld [vmem:[%s2 + $0x14c] sm:$0xf]
        %v1192 = vld [vmem:[%s2 + $0x150] sm:$0xf]
        %v1193 = vld [vmem:[%s2 + $0x154] sm:$0xf]
        %v1194 = vpack.c.bf16 %v1188, %v1188
        %v1195 = vld [vmem:[%s2 + $0x158] sm:$0xf]
        %v1196 = vld [vmem:[%s2 + $0x15c] sm:$0xf]
        %v1197 = vld [vmem:[%s2 + $0x160] sm:$0xf]
        %v1198 = vld [vmem:[%s2 + $0x164] sm:$0xf]
        %v1203 = vunpack.c.l.b16 %v1195
        %v1204 = vunpack.c.l.b16 %v1196
        %v1205 = vunpack.c.l.b16 %v1197
        %v1206 = vunpack.c.l.b16 %v1198
        %v1207 = vpack.c.b16 %v1204, %v1203
        %v1208 = vpack.c.b16 %v1206, %v1205
        %vm1211 = vcmask 261120
        %v1213 = vsel %vm1211, %v1194, 0
        %1215 = vmatpush.bf16.msra.mxu0 0
        %1216 = vmatpush.bf16.msra.mxu0 0
        %1217 = vmatpush.bf16.msra.mxu0 0
        %1218 = vmatpush.bf16.msra.mxu0 0
        %1219 = vmatpush.bf16.msra.mxu0 0
        %1220 = vmatpush.bf16.msra.mxu0 0
        %1221 = vmatpush.bf16.msra.mxu0 %v1208
        %1222 = vmatpush.bf16.msra.mxu0 %v1207
        %1223 = vmatmul.bf16.gmra.mxu0 %v1213
        %v1224 = vpop.f32.mrf.mxu0
        %v1225 = vadd.f32 0.0, %v1224
        %v1226 = vpop.f32.mrf.mxu0
        %1227 = vdwg.mxu0
        %v1232 = vunpack.c.l.b16 %v1190
        %v1233 = vunpack.c.l.b16 %v1191
        %v1234 = vunpack.c.l.b16 %v1192
        %v1235 = vunpack.c.l.b16 %v1193
        %v1236 = vpack.c.b16 %v1233, %v1232
        %v1237 = vpack.c.b16 %v1235, %v1234
        %v1241 = vsel %vm1211, %v1189, 0
        %1243 = vmatpush.bf16.msra.mxu0 0
        %1244 = vmatpush.bf16.msra.mxu0 0
        %1245 = vmatpush.bf16.msra.mxu0 0
        %1246 = vmatpush.bf16.msra.mxu0 0
        %1247 = vmatpush.bf16.msra.mxu0 0
        %1248 = vmatpush.bf16.msra.mxu0 0
        %1249 = vmatpush.bf16.msra.mxu0 %v1237
        %1250 = vmatpush.bf16.msra.mxu0 %v1236
        %1251 = vmatmul.bf16.gmra.mxu0 %v1241
        %v1252 = vpop.f32.mrf.mxu0
        %v1253 = vadd.f32 %v1225, %v1252
        %v1254 = vpop.f32.mrf.mxu0
        %1255 = vdwg.mxu0
        %v1256 = vld [vmem:[%s3 + $0x6] sm:$0x1]
        %v1257 = vadd.f32 %v1253, %v1256
        %v1258 = vmax.f32 %v1257, 0.0
        %v1259 = vpack.c.bf16 %v1258, %v1258
        %v1260 = vld [vmem:[%s2 + $0x168] sm:$0xf]
        %v1261 = vld [vmem:[%s2 + $0x16c] sm:$0xf]
        %v1262 = vld [vmem:[%s2 + $0x170] sm:$0xf]
        %v1263 = vld [vmem:[%s2 + $0x174] sm:$0xf]
        %v1264 = vld [vmem:[%s2 + $0x178] sm:$0xf]
        %v1265 = vld [vmem:[%s2 + $0x17c] sm:$0xf]
        %v1266 = vld [vmem:[%s2 + $0x180] sm:$0xf]
        %v1267 = vld [vmem:[%s2 + $0x184] sm:$0xf]
        %v1268 = vld [vmem:[%s2 + $0x188] sm:$0xf]
        %v1269 = vld [vmem:[%s2 + $0x18c] sm:$0xf]
        %v1270 = vld [vmem:[%s2 + $0x190] sm:$0xf]
        %v1271 = vld [vmem:[%s2 + $0x194] sm:$0xf]
        %v1272 = vld [vmem:[%s2 + $0x198] sm:$0xf]
        %v1273 = vld [vmem:[%s2 + $0x19c] sm:$0xf]
        %v1274 = vld [vmem:[%s2 + $0x1a0] sm:$0xf]
        %v1275 = vld [vmem:[%s2 + $0x1a4] sm:$0xf]
        %v1276 = vld [vmem:[%s3 + $0x7] sm:$0x1]
        %v1293 = vunpack.c.l.b16 %v1260
        %v1294 = vunpack.c.l.b16 %v1261
        %v1295 = vunpack.c.l.b16 %v1262
        %v1296 = vunpack.c.l.b16 %v1263
        %v1297 = vunpack.c.l.b16 %v1264
        %v1298 = vunpack.c.l.b16 %v1265
        %v1299 = vunpack.c.l.b16 %v1266
        %v1300 = vunpack.c.l.b16 %v1267
        %v1301 = vunpack.c.l.b16 %v1268
        %v1302 = vunpack.c.l.b16 %v1269
        %v1303 = vunpack.c.l.b16 %v1270
        %v1304 = vunpack.c.l.b16 %v1271
        %v1305 = vunpack.c.l.b16 %v1272
        %v1306 = vunpack.c.l.b16 %v1273
        %v1307 = vunpack.c.l.b16 %v1274
        %v1308 = vunpack.c.l.b16 %v1275
        %v1309 = vpack.c.b16 %v1294, %v1293
        %v1310 = vpack.c.b16 %v1296, %v1295
        %v1311 = vpack.c.b16 %v1298, %v1297
        %v1312 = vpack.c.b16 %v1300, %v1299
        %v1313 = vpack.c.b16 %v1302, %v1301
        %v1314 = vpack.c.b16 %v1304, %v1303
        %v1315 = vpack.c.b16 %v1306, %v1305
        %v1316 = vpack.c.b16 %v1308, %v1307
        %1325 = vmatpush.bf16.msra.mxu0 %v1316
        %1326 = vmatpush.bf16.msra.mxu0 %v1315
        %1327 = vmatpush.bf16.msra.mxu0 %v1314
        %1328 = vmatpush.bf16.msra.mxu0 %v1313
        %1329 = vmatpush.bf16.msra.mxu0 %v1312
        %1330 = vmatpush.bf16.msra.mxu0 %v1311
        %1331 = vmatpush.bf16.msra.mxu0 %v1310
        %1332 = vmatpush.bf16.msra.mxu0 %v1309
        %1333 = vmatmul.bf16.gmra.mxu0 %v1259
        %v1334 = vpop.f32.mrf.mxu0
        %v1335 = vadd.f32 %v1276, %v1334
        %v1336 = vpop.f32.mrf.mxu0
        %1337 = vdwg.mxu0
        %1338 = vst [vmem:[%s202] sm:$0x1] %v1335
        %s1339 = sand.u32 %s120, 1
        %s1340 = scalar_lea.sflag [#allocation3], %s1339
        %s1341 = sand.u32 %s120, 1
        %s1342 = scalar_lea.vmem [#allocation2], %s1341
        // Predicated region
        $region37: #{forward.1} parent=35 // pred_check
          %p1343 = pneg %p130
        $region38: #{forward.1} parent=35 // pred_check_branch
          %1345 = sbr.rel (%p1343) target = $region40
        $region39: #{forward.1} parent=35 // pred_region
          %1347 = vsyncadd %s1340, 0
          %s1348 = scalar_lea.hbm %s4, %s18
          %s1350 = sshll.u32 %s1342, 4
          %s1351 = int_to_ptr.vmem [resolvable:$true] %s1350
          %s1352 = sshll.u32 %s1348, 4
          %s1353 = int_to_ptr.hbm [resolvable:$true] %s1352
          %1355 = dma.vmem_to_hbm [thread:$0]  %s1351, 16, %s1353, %s1340
        $region40: #{forward.1} parent=35 // pred_fallthru
          _
      $region36: #{forward.1} parent=5 // pred_fallthru
        _
      %p1356 = scmp.le.s32.totalorder 2, %s13
      // Predicated region
      $region41: #{forward.1} parent=5 // pred_check
        %p1357 = pneg %p1356
      $region42: #{forward.1} parent=5 // pred_check_branch
        %1359 = sbr.rel (%p1357) target = $region44
      $region43: #{forward.1} parent=5 // pred_region
        %s1360 = ssub.s32 %s13, 2
        // Predicated region
        $region45: #{forward.1} parent=43 // pred_check
          %p1361 = pneg %p136
        $region46: #{forward.1} parent=43 // pred_check_branch
          %1363 = sbr.rel (%p1361) target = $region48
        $region47: #{forward.1} parent=43 // pred_region
          %s1364 = sand.u32 %s121, 1
          %s1365 = scalar_lea.sflag [#allocation3], %s1364
          %s1366 = sand.u32 %s121, 1
          %s1367 = scalar_lea.vmem [#allocation2], %s1366
          %1369 = dma.done %s1365, 16
        $region48: #{forward.1} parent=43 // pred_fallthru
          _
      $region44: #{forward.1} parent=5 // pred_fallthru
        _
    $region6: #{forward.1} parent=1 // loop_footer
      %s17 = sadd.s32 1, %s13
    $region7: #{forward.1} parent=1 // loop_footer_branch
      %12 = sbr.rel target = $region3
    $region8: #{forward.1} parent=1 // loop_exit
      _
    %1370 = vsyncpa [#allocation3], 1
    %s1371 = scalar_lea.sflag [#allocation3], 1
    %1372 = vsyncpa %s1371, 1

</llo_original>
